<compile_context>
chip_gen: v6e
topology: v6e:2x2x1
jax: 0.10.0
libtpu: 0.0.40
codegen_flags: <defaults>
</compile_context>

<pallas_src>
import functools

import jax
import jax.numpy as jnp
from jax.experimental import pallas as pl
from jax.experimental.pallas import tpu as pltpu

INPUT_DIM = 512
EMBED_DIM = 256
NUM_DOMAINS = 12
DOM_PAD = 128  # lane-dense padded width for the 12-way domain head output

# hidden sizes from the nn.Sequential definitions
ENC_H1, ENC_H2 = 512, 384
DISC_H1, DISC_H2 = 128, 64


def _domain_embed_kernel(
    x_ref,
    w1_ref, b1_ref, w2_ref, b2_ref, w3_ref, b3_ref,          # feature_encoder
    dw1_ref, db1_ref, dw2_ref, db2_ref, dw3_ref, db3_ref,    # domain_discriminator
    emb_ref, dom_ref,
):
    f32 = jnp.float32
    bf16 = jnp.bfloat16

    # Input arrives f32 straight from HBM; cast to bf16 in-kernel (free VPU work).
    x = x_ref[...].astype(bf16)  # [tile_b, 512]

    # ---- feature_encoder: Linear+ReLU (dropout = id), Linear+ReLU, Linear ----
    h = jnp.dot(x, w1_ref[...], preferred_element_type=f32) + b1_ref[...]
    h = jnp.maximum(h, 0.0)
    h = jnp.dot(h.astype(bf16), w2_ref[...], preferred_element_type=f32) + b2_ref[...]
    h = jnp.maximum(h, 0.0)
    emb = jnp.dot(h.astype(bf16), w3_ref[...], preferred_element_type=f32) + b3_ref[...]
    emb_ref[...] = emb.astype(emb_ref.dtype)

    # ---- domain_discriminator: Linear+ReLU, Linear+ReLU, Linear, Softmax ----
    d = jnp.dot(emb.astype(bf16), dw1_ref[...], preferred_element_type=f32) + db1_ref[...]
    d = jnp.maximum(d, 0.0)
    d = jnp.dot(d.astype(bf16), dw2_ref[...], preferred_element_type=f32) + db2_ref[...]
    d = jnp.maximum(d, 0.0)
    # dw3/db3 are padded to 128 output lanes; pad columns carry a -1e30 bias so
    # exp(pad - max) underflows to exactly 0 and does not perturb the softmax.
    # (Safe because logits stay f32.)
    logits = jnp.dot(d.astype(bf16), dw3_ref[...], preferred_element_type=f32) + db3_ref[...]

    logits = logits - jnp.max(logits, axis=-1, keepdims=True)
    e = jnp.exp(logits)
    denom = jnp.sum(e, axis=-1, keepdims=True)
    # EUP approx reciprocal + one Newton step on the [tile_b,1] column -> rows sum
    # to 1 to ~f32 accuracy while the heavy divide stays off the VALU.
    r = pl.reciprocal(denom, approx=True)
    r = r * (2.0 - denom * r)
    dom_ref[...] = (e * r).astype(dom_ref.dtype)


def _full_spec(shape):
    """BlockSpec that presents the whole (small) parameter at every grid step."""
    return pl.BlockSpec(shape, lambda i: tuple(0 for _ in shape))


def _round_up(x, m):
    return ((x + m - 1) // m) * m


def _pick_tile_b(batch):
    """Batch tile: multiple of 16 (bf16 sublane pack), capped at 512 (VMEM-safe on
    every generation), and for 32 <= B < 512 chosen so the grid has >= 2 steps so
    v7x's two TensorCores both get work (harmless extra step on 1-TC chips)."""
    if batch >= 2048:
        return 512
    if batch >= 512:
        return 256
    if batch >= 32:
        return min(256, max(16, _round_up((batch + 1) // 2, 16)))
    return max(16, _round_up(batch, 16))


@functools.partial(jax.jit, static_argnames=("tile_b", "out_dtype", "return_padded"))
def _forward_jit(features, params, tile_b, out_dtype, return_padded):
    B, D = features.shape
    assert D == INPUT_DIM

    (w1, b1, w2, b2, w3, b3, dw1, db1, dw2, db2, dw3, db3) = params

    bf16 = jnp.bfloat16
    # bf16 matmul operands for the weights (halves weight VMEM/HBM traffic, doubles
    # MXU rate); biases stay f32 and are added to the f32 accumulators. The
    # activation input is NOT pre-cast here — the kernel casts it (saves an HBM pass).
    w1, w2, w3, dw1, dw2 = (w.astype(bf16) for w in (w1, w2, w3, dw1, dw2))

    # Lane-dense domain head: pad [64,12] -> [64,128]; padded columns get zero
    # weights and a very negative bias so they vanish under softmax.
    dw3p = jnp.zeros((DISC_H2, DOM_PAD), bf16).at[:, :NUM_DOMAINS].set(dw3.astype(bf16))
    db3p = jnp.full((1, DOM_PAD), -1e30, jnp.float32).at[:, :NUM_DOMAINS].set(db3)

    # Ragged batch handling: pad batch to a multiple of tile_b, slice outputs back.
    num_tiles = pl.cdiv(B, tile_b)
    Bp = num_tiles * tile_b
    x = features
    if Bp != B:
        x = jnp.pad(x, ((0, Bp - B), (0, 0)))

    in_specs = [
        pl.BlockSpec((tile_b, INPUT_DIM), lambda i: (i, 0)),
        _full_spec(w1.shape), _full_spec(b1.shape),
        _full_spec(w2.shape), _full_spec(b2.shape),
        _full_spec(w3.shape), _full_spec(b3.shape),
        _full_spec(dw1.shape), _full_spec(db1.shape),
        _full_spec(dw2.shape), _full_spec(db2.shape),
        _full_spec(dw3p.shape), _full_spec(db3p.shape),
    ]
    out_specs = [
        pl.BlockSpec((tile_b, EMBED_DIM), lambda i: (i, 0)),
        pl.BlockSpec((tile_b, DOM_PAD), lambda i: (i, 0)),
    ]
    out_shape = [
        jax.ShapeDtypeStruct((Bp, EMBED_DIM), out_dtype),
        jax.ShapeDtypeStruct((Bp, DOM_PAD), out_dtype),
    ]

    emb, dom = pl.pallas_call(
        _domain_embed_kernel,
        grid=(num_tiles,),
        in_specs=in_specs,
        out_specs=out_specs,
        out_shape=out_shape,
        compiler_params=pltpu.CompilerParams(
            dimension_semantics=("parallel",),
            vmem_limit_bytes=48 * 1024 * 1024,
        ),
    )(x, w1, b1, w2, b2, w3, b3, dw1, db1, dw2, db2, dw3p, db3p)

    if return_padded:
        # Hand fused consumers the lane-dense padded slabs directly (no extra
        # XLA slice pass). Valid rows are [:B]; valid domain lanes are [:, :12].
        return emb, dom

    emb_out = emb if Bp == B else emb[:B]
    dom_out = dom[:B, :NUM_DOMAINS]
    return emb_out, dom_out


def domain_embedding_forward(features, params, *, tile_b=None,
                             out_dtype=jnp.bfloat16, return_padded=False):
    """features: [B, INPUT_DIM] f32.

    Returns (embeddings [B,256], domain_pred [B,12]) in `out_dtype` (default bf16,
    which halves output HBM traffic; pass jnp.float32 if downstream needs f32).
    With return_padded=True, returns the padded [Bp,256] / lane-dense [Bp,128]
    slabs (no post-kernel slice copies).
    """
    if tile_b is None:
        tile_b = _pick_tile_b(features.shape[0])
    return _forward_jit(features, params, tile_b, out_dtype, return_padded)


def init_params(key):
    """Deterministic synthetic weights. Linear layer i: W [in, out], b [1, out]."""
    dims_enc = [(INPUT_DIM, ENC_H1), (ENC_H1, ENC_H2), (ENC_H2, EMBED_DIM)]
    dims_disc = [(EMBED_DIM, DISC_H1), (DISC_H1, DISC_H2), (DISC_H2, NUM_DOMAINS)]
    params = []
    for (fan_in, fan_out) in dims_enc + dims_disc:
        key, kw, kb = jax.random.split(key, 3)
        scale = 1.0 / jnp.sqrt(jnp.float32(fan_in))
        w = jax.random.uniform(kw, (fan_in, fan_out), jnp.float32, -scale, scale)
        b = jax.random.uniform(kb, (1, fan_out), jnp.float32, -scale, scale)
        params += [w, b]
    return tuple(params)


def _reference_forward(features, params):
    """Pure-JAX reference with the same bf16-operand / f32-accumulate recipe."""
    (w1, b1, w2, b2, w3, b3, dw1, db1, dw2, db2, dw3, db3) = params
    bf16 = jnp.bfloat16

    def mm(a, w):
        return jnp.dot(a.astype(bf16), w.astype(bf16), preferred_element_type=jnp.float32)

    h = jax.nn.relu(mm(features, w1) + b1)
    h = jax.nn.relu(mm(h, w2) + b2)
    emb = mm(h, w3) + b3
    d = jax.nn.relu(mm(emb, dw1) + db1)
    d = jax.nn.relu(mm(d, dw2) + db2)
    dom = jax.nn.softmax(mm(d, dw3) + db3, axis=-1)
    return emb, dom


if __name__ == "__main__":
    key = jax.random.PRNGKey(0)
    kp, kx1, kx2 = jax.random.split(key, 3)
    params = init_params(kp)

    # --- small ragged batch, f32 outputs (tight parity vs reference) ---
    batch_small = 20
    feats_s = jax.random.normal(kx1, (batch_small, INPUT_DIM), jnp.float32)
    emb_s, dom_s = domain_embedding_forward(feats_s, params, out_dtype=jnp.float32)
    emb_s, dom_s = jax.block_until_ready((emb_s, dom_s))

    ref_e, ref_d = _reference_forward(feats_s, params)
    assert emb_s.shape == (batch_small, EMBED_DIM)
    assert dom_s.shape == (batch_small, NUM_DOMAINS)
    assert jnp.allclose(emb_s, ref_e, atol=1e-3, rtol=1e-3)
    assert jnp.allclose(dom_s, ref_d, atol=1e-2)
    assert jnp.allclose(dom_s.sum(-1), 1.0, atol=1e-3)

    # --- larger ragged batch, default bf16 outputs, >=2 grid steps (megacore) ---
    batch_big = 300
    feats_b = jax.random.normal(kx2, (batch_big, INPUT_DIM), jnp.float32)
    emb_b, dom_b = domain_embedding_forward(feats_b, params)
    emb_b, dom_b = jax.block_until_ready((emb_b, dom_b))

    ref_e, ref_d = _reference_forward(feats_b, params)
    assert emb_b.shape == (batch_big, EMBED_DIM)
    assert dom_b.shape == (batch_big, NUM_DOMAINS)
    assert emb_b.dtype == jnp.bfloat16 and dom_b.dtype == jnp.bfloat16
    assert jnp.allclose(emb_b.astype(jnp.float32), ref_e, atol=2e-2, rtol=2e-2)
    assert jnp.allclose(dom_b.astype(jnp.float32), ref_d, atol=2e-2)
    assert jnp.allclose(dom_b.astype(jnp.float32).sum(-1), 1.0, atol=2e-2)

    # --- padded-slab path for fused consumers (no post-kernel slice copies) ---
    emb_p, dom_p = domain_embedding_forward(feats_b, params, return_padded=True)
    emb_p, dom_p = jax.block_until_ready((emb_p, dom_p))
    assert emb_p.shape[1] == EMBED_DIM and dom_p.shape[1] == DOM_PAD
    assert emb_p.shape[0] == dom_p.shape[0] and emb_p.shape[0] >= batch_big
    assert jnp.allclose(dom_p[:batch_big, :NUM_DOMAINS].astype(jnp.float32), ref_d, atol=2e-2)

    print("KERNEL_OK")
</pallas_src>

<mosaic_0001>
module attributes {stable_mosaic.version = 11 : i64} {
  func.func @_domain_embed_kernel(%arg0: i32, %arg1: memref<32x512xf32, #tpu.memory_space<vmem>>, %arg2: memref<512x512xbf16, #tpu.memory_space<vmem>>, %arg3: memref<1x512xf32, #tpu.memory_space<vmem>>, %arg4: memref<512x384xbf16, #tpu.memory_space<vmem>>, %arg5: memref<1x384xf32, #tpu.memory_space<vmem>>, %arg6: memref<384x256xbf16, #tpu.memory_space<vmem>>, %arg7: memref<1x256xf32, #tpu.memory_space<vmem>>, %arg8: memref<256x128xbf16, #tpu.memory_space<vmem>>, %arg9: memref<1x128xf32, #tpu.memory_space<vmem>>, %arg10: memref<128x64xbf16, #tpu.memory_space<vmem>>, %arg11: memref<1x64xf32, #tpu.memory_space<vmem>>, %arg12: memref<64x128xbf16, #tpu.memory_space<vmem>>, %arg13: memref<1x128xf32, #tpu.memory_space<vmem>>, %arg14: memref<32x256xf32, #tpu.memory_space<vmem>>, %arg15: memref<32x128xf32, #tpu.memory_space<vmem>>) attributes {dimension_semantics = [#tpu.dimension_semantics<parallel>], iteration_bounds = array<i64: 1>, scalar_prefetch = 0 : i64, scratch_operands = 0 : i64, tpu.core_type = #tpu.core_type<tc>, window_params = [{transform_indices = @transform_0, window_bounds = array<i64: 32, 512>}, {pipeline_mode = #tpu.pipeline_mode<synchronous>, transform_indices = @transform_1, window_bounds = array<i64: 512, 512>}, {pipeline_mode = #tpu.pipeline_mode<synchronous>, transform_indices = @transform_2, window_bounds = array<i64: 1, 512>}, {pipeline_mode = #tpu.pipeline_mode<synchronous>, transform_indices = @transform_3, window_bounds = array<i64: 512, 384>}, {pipeline_mode = #tpu.pipeline_mode<synchronous>, transform_indices = @transform_4, window_bounds = array<i64: 1, 384>}, {pipeline_mode = #tpu.pipeline_mode<synchronous>, transform_indices = @transform_5, window_bounds = array<i64: 384, 256>}, {pipeline_mode = #tpu.pipeline_mode<synchronous>, transform_indices = @transform_6, window_bounds = array<i64: 1, 256>}, {pipeline_mode = #tpu.pipeline_mode<synchronous>, transform_indices = @transform_7, window_bounds = array<i64: 256, 128>}, {pipeline_mode = #tpu.pipeline_mode<synchronous>, transform_indices = @transform_8, window_bounds = array<i64: 1, 128>}, {pipeline_mode = #tpu.pipeline_mode<synchronous>, transform_indices = @transform_9, window_bounds = array<i64: 128, 64>}, {pipeline_mode = #tpu.pipeline_mode<synchronous>, transform_indices = @transform_10, window_bounds = array<i64: 1, 64>}, {pipeline_mode = #tpu.pipeline_mode<synchronous>, transform_indices = @transform_11, window_bounds = array<i64: 64, 128>}, {pipeline_mode = #tpu.pipeline_mode<synchronous>, transform_indices = @transform_12, window_bounds = array<i64: 1, 128>}, {transform_indices = @transform_13, window_bounds = array<i64: 32, 256>}, {transform_indices = @transform_14, window_bounds = array<i64: 32, 128>}]} {
    %c0 = arith.constant 0 : index
    %c0_0 = arith.constant 0 : index
    %0 = vector.load %arg1[%c0, %c0_0] : memref<32x512xf32, #tpu.memory_space<vmem>>, vector<32x512xf32>
    %1 = arith.truncf %0 : vector<32x512xf32> to vector<32x512xbf16>
    %c0_1 = arith.constant 0 : index
    %c0_2 = arith.constant 0 : index
    %2 = vector.load %arg2[%c0_1, %c0_2] : memref<512x512xbf16, #tpu.memory_space<vmem>>, vector<512x512xbf16>
    %cst = arith.constant dense<0.000000e+00> : vector<32x512xf32>
    %3 = tpu.matmul %1, %2, %cst {dimension_numbers = #tpu.dot_dimension_numbers<[1], [0], [0], [1], [0, 0, 1, 1], [], []>} : vector<32x512xbf16>, vector<512x512xbf16>, vector<32x512xf32> -> vector<32x512xf32>
    %c0_3 = arith.constant 0 : index
    %c0_4 = arith.constant 0 : index
    %4 = vector.load %arg3[%c0_3, %c0_4] : memref<1x512xf32, #tpu.memory_space<vmem>>, vector<1x512xf32>
    %5 = vector.broadcast %4 : vector<1x512xf32> to vector<32x512xf32>
    %6 = arith.addf %3, %5 : vector<32x512xf32>
    %cst_5 = arith.constant 0.000000e+00 : f32
    %7 = vector.broadcast %cst_5 : f32 to vector<32x512xf32>
    %8 = arith.maximumf %6, %7 : vector<32x512xf32>
    %9 = arith.truncf %8 : vector<32x512xf32> to vector<32x512xbf16>
    %c0_6 = arith.constant 0 : index
    %c0_7 = arith.constant 0 : index
    %10 = vector.load %arg4[%c0_6, %c0_7] : memref<512x384xbf16, #tpu.memory_space<vmem>>, vector<512x384xbf16>
    %cst_8 = arith.constant dense<0.000000e+00> : vector<32x384xf32>
    %11 = tpu.matmul %9, %10, %cst_8 {dimension_numbers = #tpu.dot_dimension_numbers<[1], [0], [0], [1], [0, 0, 1, 1], [], []>} : vector<32x512xbf16>, vector<512x384xbf16>, vector<32x384xf32> -> vector<32x384xf32>
    %c0_9 = arith.constant 0 : index
    %c0_10 = arith.constant 0 : index
    %12 = vector.load %arg5[%c0_9, %c0_10] : memref<1x384xf32, #tpu.memory_space<vmem>>, vector<1x384xf32>
    %13 = vector.broadcast %12 : vector<1x384xf32> to vector<32x384xf32>
    %14 = arith.addf %11, %13 : vector<32x384xf32>
    %cst_11 = arith.constant 0.000000e+00 : f32
    %15 = vector.broadcast %cst_11 : f32 to vector<32x384xf32>
    %16 = arith.maximumf %14, %15 : vector<32x384xf32>
    %17 = arith.truncf %16 : vector<32x384xf32> to vector<32x384xbf16>
    %c0_12 = arith.constant 0 : index
    %c0_13 = arith.constant 0 : index
    %18 = vector.load %arg6[%c0_12, %c0_13] : memref<384x256xbf16, #tpu.memory_space<vmem>>, vector<384x256xbf16>
    %cst_14 = arith.constant dense<0.000000e+00> : vector<32x256xf32>
    %19 = tpu.matmul %17, %18, %cst_14 {dimension_numbers = #tpu.dot_dimension_numbers<[1], [0], [0], [1], [0, 0, 1, 1], [], []>} : vector<32x384xbf16>, vector<384x256xbf16>, vector<32x256xf32> -> vector<32x256xf32>
    %c0_15 = arith.constant 0 : index
    %c0_16 = arith.constant 0 : index
    %20 = vector.load %arg7[%c0_15, %c0_16] : memref<1x256xf32, #tpu.memory_space<vmem>>, vector<1x256xf32>
    %21 = vector.broadcast %20 : vector<1x256xf32> to vector<32x256xf32>
    %22 = arith.addf %19, %21 : vector<32x256xf32>
    %c0_17 = arith.constant 0 : index
    %c0_18 = arith.constant 0 : index
    %23 = vector.load %arg14[%c0_17, %c0_18] : memref<32x256xf32, #tpu.memory_space<vmem>>, vector<32x256xf32>
    tpu.vector_store %arg14[%c0_17, %c0_18], %22 {strides = array<i32>} : memref<32x256xf32, #tpu.memory_space<vmem>>, vector<32x256xf32>,
    %24 = arith.truncf %22 : vector<32x256xf32> to vector<32x256xbf16>
    %c0_19 = arith.constant 0 : index
    %c0_20 = arith.constant 0 : index
    %25 = vector.load %arg8[%c0_19, %c0_20] : memref<256x128xbf16, #tpu.memory_space<vmem>>, vector<256x128xbf16>
    %cst_21 = arith.constant dense<0.000000e+00> : vector<32x128xf32>
    %26 = tpu.matmul %24, %25, %cst_21 {dimension_numbers = #tpu.dot_dimension_numbers<[1], [0], [0], [1], [0, 0, 1, 1], [], []>} : vector<32x256xbf16>, vector<256x128xbf16>, vector<32x128xf32> -> vector<32x128xf32>
    %c0_22 = arith.constant 0 : index
    %c0_23 = arith.constant 0 : index
    %27 = vector.load %arg9[%c0_22, %c0_23] : memref<1x128xf32, #tpu.memory_space<vmem>>, vector<1x128xf32>
    %28 = vector.broadcast %27 : vector<1x128xf32> to vector<32x128xf32>
    %29 = arith.addf %26, %28 : vector<32x128xf32>
    %cst_24 = arith.constant 0.000000e+00 : f32
    %30 = vector.broadcast %cst_24 : f32 to vector<32x128xf32>
    %31 = arith.maximumf %29, %30 : vector<32x128xf32>
    %32 = arith.truncf %31 : vector<32x128xf32> to vector<32x128xbf16>
    %c0_25 = arith.constant 0 : index
    %c0_26 = arith.constant 0 : index
    %33 = vector.load %arg10[%c0_25, %c0_26] : memref<128x64xbf16, #tpu.memory_space<vmem>>, vector<128x64xbf16>
    %cst_27 = arith.constant dense<0.000000e+00> : vector<32x64xf32>
    %34 = tpu.matmul %32, %33, %cst_27 {dimension_numbers = #tpu.dot_dimension_numbers<[1], [0], [0], [1], [0, 0, 1, 1], [], []>} : vector<32x128xbf16>, vector<128x64xbf16>, vector<32x64xf32> -> vector<32x64xf32>
    %c0_28 = arith.constant 0 : index
    %c0_29 = arith.constant 0 : index
    %35 = vector.load %arg11[%c0_28, %c0_29] : memref<1x64xf32, #tpu.memory_space<vmem>>, vector<1x64xf32>
    %36 = vector.broadcast %35 : vector<1x64xf32> to vector<32x64xf32>
    %37 = arith.addf %34, %36 : vector<32x64xf32>
    %cst_30 = arith.constant 0.000000e+00 : f32
    %38 = vector.broadcast %cst_30 : f32 to vector<32x64xf32>
    %39 = arith.maximumf %37, %38 : vector<32x64xf32>
    %40 = arith.truncf %39 : vector<32x64xf32> to vector<32x64xbf16>
    %c0_31 = arith.constant 0 : index
    %c0_32 = arith.constant 0 : index
    %41 = vector.load %arg12[%c0_31, %c0_32] : memref<64x128xbf16, #tpu.memory_space<vmem>>, vector<64x128xbf16>
    %cst_33 = arith.constant dense<0.000000e+00> : vector<32x128xf32>
    %42 = tpu.matmul %40, %41, %cst_33 {dimension_numbers = #tpu.dot_dimension_numbers<[1], [0], [0], [1], [0, 0, 1, 1], [], []>} : vector<32x64xbf16>, vector<64x128xbf16>, vector<32x128xf32> -> vector<32x128xf32>
    %c0_34 = arith.constant 0 : index
    %c0_35 = arith.constant 0 : index
    %43 = vector.load %arg13[%c0_34, %c0_35] : memref<1x128xf32, #tpu.memory_space<vmem>>, vector<1x128xf32>
    %44 = vector.broadcast %43 : vector<1x128xf32> to vector<32x128xf32>
    %45 = arith.addf %42, %44 : vector<32x128xf32>
    %cst_36 = arith.constant dense<0xFF800000> : vector<32xf32>
    %46 = vector.multi_reduction <maximumf>, %45, %cst_36 [1] : vector<32x128xf32> to vector<32xf32>
    %47 = vector.shape_cast %46 : vector<32xf32> to vector<32x1xf32>
    %48 = vector.broadcast %47 : vector<32x1xf32> to vector<32x128xf32>
    %49 = arith.subf %45, %48 : vector<32x128xf32>
    %50 = math.exp %49 : vector<32x128xf32>
    %cst_37 = arith.constant dense<0.000000e+00> : vector<32xf32>
    %51 = vector.multi_reduction <add>, %50, %cst_37 [1] : vector<32x128xf32> to vector<32xf32>
    %52 = vector.shape_cast %51 : vector<32xf32> to vector<32x1xf32>
    %53 = tpu.reciprocal %52 {approx = true} : vector<32x1xf32> -> vector<32x1xf32>
    %54 = arith.mulf %52, %53 : vector<32x1xf32>
    %cst_38 = arith.constant 2.000000e+00 : f32
    %55 = vector.broadcast %cst_38 : f32 to vector<32x1xf32>
    %56 = arith.subf %55, %54 : vector<32x1xf32>
    %57 = arith.mulf %53, %56 : vector<32x1xf32>
    %58 = vector.broadcast %57 : vector<32x1xf32> to vector<32x128xf32>
    %59 = arith.mulf %50, %58 : vector<32x128xf32>
    %c0_39 = arith.constant 0 : index
    %c0_40 = arith.constant 0 : index
    %60 = vector.load %arg15[%c0_39, %c0_40] : memref<32x128xf32, #tpu.memory_space<vmem>>, vector<32x128xf32>
    tpu.vector_store %arg15[%c0_39, %c0_40], %59 {strides = array<i32>} : memref<32x128xf32, #tpu.memory_space<vmem>>, vector<32x128xf32>,
    return
  }
  func.func @transform_0(%arg0: i32) -> (i32, i32) {
    %c0_i32 = arith.constant 0 : i32
    %c0_i32_0 = arith.constant 0 : i32
    return %arg0, %c0_i32 : i32, i32
  }
  func.func @transform_1(%arg0: i32) -> (i32, i32) {
    %c0_i32 = arith.constant 0 : i32
    %c0_i32_0 = arith.constant 0 : i32
    %c0_i32_1 = arith.constant 0 : i32
    return %c0_i32, %c0_i32_0 : i32, i32
  }
  func.func @transform_2(%arg0: i32) -> (i32, i32) {
    %c0_i32 = arith.constant 0 : i32
    %c0_i32_0 = arith.constant 0 : i32
    %c0_i32_1 = arith.constant 0 : i32
    return %c0_i32, %c0_i32_0 : i32, i32
  }
  func.func @transform_3(%arg0: i32) -> (i32, i32) {
    %c0_i32 = arith.constant 0 : i32
    %c0_i32_0 = arith.constant 0 : i32
    %c0_i32_1 = arith.constant 0 : i32
    return %c0_i32, %c0_i32_0 : i32, i32
  }
  func.func @transform_4(%arg0: i32) -> (i32, i32) {
    %c0_i32 = arith.constant 0 : i32
    %c0_i32_0 = arith.constant 0 : i32
    %c0_i32_1 = arith.constant 0 : i32
    return %c0_i32, %c0_i32_0 : i32, i32
  }
  func.func @transform_5(%arg0: i32) -> (i32, i32) {
    %c0_i32 = arith.constant 0 : i32
    %c0_i32_0 = arith.constant 0 : i32
    %c0_i32_1 = arith.constant 0 : i32
    return %c0_i32, %c0_i32_0 : i32, i32
  }
  func.func @transform_6(%arg0: i32) -> (i32, i32) {
    %c0_i32 = arith.constant 0 : i32
    %c0_i32_0 = arith.constant 0 : i32
    %c0_i32_1 = arith.constant 0 : i32
    return %c0_i32, %c0_i32_0 : i32, i32
  }
  func.func @transform_7(%arg0: i32) -> (i32, i32) {
    %c0_i32 = arith.constant 0 : i32
    %c0_i32_0 = arith.constant 0 : i32
    %c0_i32_1 = arith.constant 0 : i32
    return %c0_i32, %c0_i32_0 : i32, i32
  }
  func.func @transform_8(%arg0: i32) -> (i32, i32) {
    %c0_i32 = arith.constant 0 : i32
    %c0_i32_0 = arith.constant 0 : i32
    %c0_i32_1 = arith.constant 0 : i32
    return %c0_i32, %c0_i32_0 : i32, i32
  }
  func.func @transform_9(%arg0: i32) -> (i32, i32) {
    %c0_i32 = arith.constant 0 : i32
    %c0_i32_0 = arith.constant 0 : i32
    %c0_i32_1 = arith.constant 0 : i32
    return %c0_i32, %c0_i32_0 : i32, i32
  }
  func.func @transform_10(%arg0: i32) -> (i32, i32) {
    %c0_i32 = arith.constant 0 : i32
    %c0_i32_0 = arith.constant 0 : i32
    %c0_i32_1 = arith.constant 0 : i32
    return %c0_i32, %c0_i32_0 : i32, i32
  }
  func.func @transform_11(%arg0: i32) -> (i32, i32) {
    %c0_i32 = arith.constant 0 : i32
    %c0_i32_0 = arith.constant 0 : i32
    %c0_i32_1 = arith.constant 0 : i32
    return %c0_i32, %c0_i32_0 : i32, i32
  }
  func.func @transform_12(%arg0: i32) -> (i32, i32) {
    %c0_i32 = arith.constant 0 : i32
    %c0_i32_0 = arith.constant 0 : i32
    %c0_i32_1 = arith.constant 0 : i32
    return %c0_i32, %c0_i32_0 : i32, i32
  }
  func.func @transform_13(%arg0: i32) -> (i32, i32) {
    %c0_i32 = arith.constant 0 : i32
    %c0_i32_0 = arith.constant 0 : i32
    return %arg0, %c0_i32 : i32, i32
  }
  func.func @transform_14(%arg0: i32) -> (i32, i32) {
    %c0_i32 = arith.constant 0 : i32
    %c0_i32_0 = arith.constant 0 : i32
    return %arg0, %c0_i32 : i32, i32
  }
}

</mosaic_0001>

<llo_original>
// kernel: _forward_jit.1
$region0: #{_forward_jit.1}
  #allocation0 [shape = 'u32[]', space=smem, size = 0x4, offset = 0x4, fixed_abs, tag = 'smem constant byte address 0x4 - core index']
  #allocation1 [shape = 'u32[144,128]{1,0:T(1,128)}', space=vmem, size = 0x12000, scoped, tag = 'internal scratch']
  %s0 = inlined_call_operand.vmem [shape: f32[32,512], index: 0, kind: input, shape index: {}]
  %s1 = inlined_call_operand.vmem [shape: bf16[512,512], index: 1, kind: input, shape index: {}]
  %s2 = inlined_call_operand.vmem [shape: f32[1,512], index: 2, kind: input, shape index: {}]
  %s3 = inlined_call_operand.vmem [shape: bf16[512,384], index: 3, kind: input, shape index: {}]
  %s4 = inlined_call_operand.vmem [shape: f32[1,384], index: 4, kind: input, shape index: {}]
  %s5 = inlined_call_operand.vmem [shape: bf16[384,256], index: 5, kind: input, shape index: {}]
  %s6 = inlined_call_operand.vmem [shape: f32[1,256], index: 6, kind: input, shape index: {}]
  %s7 = inlined_call_operand.vmem [shape: bf16[256,128], index: 7, kind: input, shape index: {}]
  %s8 = inlined_call_operand.vmem [shape: f32[1,128], index: 8, kind: input, shape index: {}]
  %s9 = inlined_call_operand.vmem [shape: bf16[128,64], index: 9, kind: input, shape index: {}]
  %s10 = inlined_call_operand.vmem [shape: f32[1,64], index: 10, kind: input, shape index: {}]
  %s11 = inlined_call_operand.vmem [shape: bf16[64,128], index: 11, kind: input, shape index: {}]
  %s12 = inlined_call_operand.vmem [shape: f32[1,128], index: 12, kind: input, shape index: {}]
  %s13 = inlined_call_operand.vmem [shape: f32[32,256], index: 13, kind: output, shape index: {0}]
  %s14 = inlined_call_operand.vmem [shape: f32[32,128], index: 14, kind: output, shape index: {1}]
  %15 = xla_tuple %s13, %s14
  %s16 = sld [smem:[#allocation0]]
  $region70: #{_forward_jit.1} parent=0
    _
  %s18 = ssub.s32 1, %s16
  %s19 = scalar_select 0, %s18, %s16
  // Predicated region
  $region2: #{_forward_jit.1} parent=0 // pred_check
    _
  $region3: #{_forward_jit.1} parent=0 // pred_check_branch
    %21 = sbr.rel (0) target = $region5
  $region4: #{_forward_jit.1} parent=0 // pred_region
    _
  $region5: #{_forward_jit.1} parent=0 // pred_fallthru
    _
  // Predicated region
  $region6: #{_forward_jit.1} parent=0 // pred_check
    _
  $region7: #{_forward_jit.1} parent=0 // pred_check_branch
    %23 = sbr.rel (0) target = $region9
  $region8: #{_forward_jit.1} parent=0 // pred_region
    _
  $region9: #{_forward_jit.1} parent=0 // pred_fallthru
    _
  // Predicated region
  $region10: #{_forward_jit.1} parent=0 // pred_check
    _
  $region11: #{_forward_jit.1} parent=0 // pred_check_branch
    %25 = sbr.rel (0) target = $region13
  $region12: #{_forward_jit.1} parent=0 // pred_region
    _
  $region13: #{_forward_jit.1} parent=0 // pred_fallthru
    _
  // Predicated region
  $region14: #{_forward_jit.1} parent=0 // pred_check
    _
  $region15: #{_forward_jit.1} parent=0 // pred_check_branch
    %27 = sbr.rel (0) target = $region17
  $region16: #{_forward_jit.1} parent=0 // pred_region
    _
  $region17: #{_forward_jit.1} parent=0 // pred_fallthru
    _
  // Predicated region
  $region18: #{_forward_jit.1} parent=0 // pred_check
    _
  $region19: #{_forward_jit.1} parent=0 // pred_check_branch
    %29 = sbr.rel (0) target = $region21
  $region20: #{_forward_jit.1} parent=0 // pred_region
    _
  $region21: #{_forward_jit.1} parent=0 // pred_fallthru
    _
  // Predicated region
  $region22: #{_forward_jit.1} parent=0 // pred_check
    _
  $region23: #{_forward_jit.1} parent=0 // pred_check_branch
    %31 = sbr.rel (0) target = $region25
  $region24: #{_forward_jit.1} parent=0 // pred_region
    _
  $region25: #{_forward_jit.1} parent=0 // pred_fallthru
    _
  // Predicated region
  $region26: #{_forward_jit.1} parent=0 // pred_check
    _
  $region27: #{_forward_jit.1} parent=0 // pred_check_branch
    %33 = sbr.rel (0) target = $region29
  $region28: #{_forward_jit.1} parent=0 // pred_region
    _
  $region29: #{_forward_jit.1} parent=0 // pred_fallthru
    _
  // Predicated region
  $region30: #{_forward_jit.1} parent=0 // pred_check
    _
  $region31: #{_forward_jit.1} parent=0 // pred_check_branch
    %35 = sbr.rel (0) target = $region33
  $region32: #{_forward_jit.1} parent=0 // pred_region
    _
  $region33: #{_forward_jit.1} parent=0 // pred_fallthru
    _
  // Predicated region
  $region34: #{_forward_jit.1} parent=0 // pred_check
    _
  $region35: #{_forward_jit.1} parent=0 // pred_check_branch
    %37 = sbr.rel (0) target = $region37
  $region36: #{_forward_jit.1} parent=0 // pred_region
    _
  $region37: #{_forward_jit.1} parent=0 // pred_fallthru
    _
  // Predicated region
  $region38: #{_forward_jit.1} parent=0 // pred_check
    _
  $region39: #{_forward_jit.1} parent=0 // pred_check_branch
    %39 = sbr.rel (0) target = $region41
  $region40: #{_forward_jit.1} parent=0 // pred_region
    _
  $region41: #{_forward_jit.1} parent=0 // pred_fallthru
    _
  // Predicated region
  $region42: #{_forward_jit.1} parent=0 // pred_check
    _
  $region43: #{_forward_jit.1} parent=0 // pred_check_branch
    %41 = sbr.rel (0) target = $region45
  $region44: #{_forward_jit.1} parent=0 // pred_region
    _
  $region45: #{_forward_jit.1} parent=0 // pred_fallthru
    _
  // Predicated region
  $region46: #{_forward_jit.1} parent=0 // pred_check
    _
  $region47: #{_forward_jit.1} parent=0 // pred_check_branch
    %43 = sbr.rel (0) target = $region49
  $region48: #{_forward_jit.1} parent=0 // pred_region
    _
  $region49: #{_forward_jit.1} parent=0 // pred_fallthru
    _
  // Predicated region
  $region50: #{_forward_jit.1} parent=0 // pred_check
    _
  $region51: #{_forward_jit.1} parent=0 // pred_check_branch
    %45 = sbr.rel (0) target = $region53
  $region52: #{_forward_jit.1} parent=0 // pred_region
    _
  $region53: #{_forward_jit.1} parent=0 // pred_fallthru
    _
  %v47 = vld [vmem:[%s0] sm:$0xff]
  %v48 = vld [vmem:[%s0 + $0x8] sm:$0xff]
  %v49 = vld [vmem:[%s0 + $0x10] sm:$0xff]
  %v50 = vld [vmem:[%s0 + $0x18] sm:$0xff]
  %v51 = vld [vmem:[%s0 + $0x20] sm:$0xff]
  %v52 = vld [vmem:[%s0 + $0x28] sm:$0xff]
  %v53 = vld [vmem:[%s0 + $0x30] sm:$0xff]
  %v54 = vld [vmem:[%s0 + $0x38] sm:$0xff]
  %v55 = vld [vmem:[%s0 + $0x40] sm:$0xff]
  %v56 = vld [vmem:[%s0 + $0x48] sm:$0xff]
  %v57 = vld [vmem:[%s0 + $0x50] sm:$0xff]
  %v58 = vld [vmem:[%s0 + $0x58] sm:$0xff]
  %v59 = vld [vmem:[%s0 + $0x60] sm:$0xff]
  %v60 = vld [vmem:[%s0 + $0x68] sm:$0xff]
  %v61 = vld [vmem:[%s0 + $0x70] sm:$0xff]
  %v62 = vld [vmem:[%s0 + $0x78] sm:$0xff]
  %v63 = vpack.c.bf16 %v51, %v47
  %v64 = vpack.c.bf16 %v52, %v48
  %v65 = vpack.c.bf16 %v53, %v49
  %v66 = vpack.c.bf16 %v54, %v50
  %v67 = vpack.c.bf16 %v59, %v55
  %v68 = vpack.c.bf16 %v60, %v56
  %v69 = vpack.c.bf16 %v61, %v57
  %v70 = vpack.c.bf16 %v62, %v58
  %v71 = vld [vmem:[%s1] sm:$0xff]
  %v72 = vld [vmem:[%s1 + $0x8] sm:$0xff]
  %v73 = vld [vmem:[%s1 + $0x10] sm:$0xff]
  %v74 = vld [vmem:[%s1 + $0x18] sm:$0xff]
  %v75 = vld [vmem:[%s1 + $0x20] sm:$0xff]
  %v76 = vld [vmem:[%s1 + $0x28] sm:$0xff]
  %v77 = vld [vmem:[%s1 + $0x30] sm:$0xff]
  %v78 = vld [vmem:[%s1 + $0x38] sm:$0xff]
  %v79 = vld [vmem:[%s1 + $0x40] sm:$0xff]
  %v80 = vld [vmem:[%s1 + $0x48] sm:$0xff]
  %v81 = vld [vmem:[%s1 + $0x50] sm:$0xff]
  %v82 = vld [vmem:[%s1 + $0x58] sm:$0xff]
  %v83 = vld [vmem:[%s1 + $0x60] sm:$0xff]
  %v84 = vld [vmem:[%s1 + $0x68] sm:$0xff]
  %v85 = vld [vmem:[%s1 + $0x70] sm:$0xff]
  %v86 = vld [vmem:[%s1 + $0x78] sm:$0xff]
  %v87 = vld [vmem:[%s1 + $0x80] sm:$0xff]
  %v88 = vld [vmem:[%s1 + $0x88] sm:$0xff]
  %v89 = vld [vmem:[%s1 + $0x90] sm:$0xff]
  %v90 = vld [vmem:[%s1 + $0x98] sm:$0xff]
  %v91 = vld [vmem:[%s1 + $0xa0] sm:$0xff]
  %v92 = vld [vmem:[%s1 + $0xa8] sm:$0xff]
  %v93 = vld [vmem:[%s1 + $0xb0] sm:$0xff]
  %v94 = vld [vmem:[%s1 + $0xb8] sm:$0xff]
  %v95 = vld [vmem:[%s1 + $0xc0] sm:$0xff]
  %v96 = vld [vmem:[%s1 + $0xc8] sm:$0xff]
  %v97 = vld [vmem:[%s1 + $0xd0] sm:$0xff]
  %v98 = vld [vmem:[%s1 + $0xd8] sm:$0xff]
  %v99 = vld [vmem:[%s1 + $0xe0] sm:$0xff]
  %v100 = vld [vmem:[%s1 + $0xe8] sm:$0xff]
  %v101 = vld [vmem:[%s1 + $0xf0] sm:$0xff]
  %v102 = vld [vmem:[%s1 + $0xf8] sm:$0xff]
  %v103 = vld [vmem:[%s1 + $0x100] sm:$0xff]
  %v104 = vld [vmem:[%s1 + $0x108] sm:$0xff]
  %v105 = vld [vmem:[%s1 + $0x110] sm:$0xff]
  %v106 = vld [vmem:[%s1 + $0x118] sm:$0xff]
  %v107 = vld [vmem:[%s1 + $0x120] sm:$0xff]
  %v108 = vld [vmem:[%s1 + $0x128] sm:$0xff]
  %v109 = vld [vmem:[%s1 + $0x130] sm:$0xff]
  %v110 = vld [vmem:[%s1 + $0x138] sm:$0xff]
  %v111 = vld [vmem:[%s1 + $0x140] sm:$0xff]
  %v112 = vld [vmem:[%s1 + $0x148] sm:$0xff]
  %v113 = vld [vmem:[%s1 + $0x150] sm:$0xff]
  %v114 = vld [vmem:[%s1 + $0x158] sm:$0xff]
  %v115 = vld [vmem:[%s1 + $0x160] sm:$0xff]
  %v116 = vld [vmem:[%s1 + $0x168] sm:$0xff]
  %v117 = vld [vmem:[%s1 + $0x170] sm:$0xff]
  %v118 = vld [vmem:[%s1 + $0x178] sm:$0xff]
  %v119 = vld [vmem:[%s1 + $0x180] sm:$0xff]
  %v120 = vld [vmem:[%s1 + $0x188] sm:$0xff]
  %v121 = vld [vmem:[%s1 + $0x190] sm:$0xff]
  %v122 = vld [vmem:[%s1 + $0x198] sm:$0xff]
  %v123 = vld [vmem:[%s1 + $0x1a0] sm:$0xff]
  %v124 = vld [vmem:[%s1 + $0x1a8] sm:$0xff]
  %v125 = vld [vmem:[%s1 + $0x1b0] sm:$0xff]
  %v126 = vld [vmem:[%s1 + $0x1b8] sm:$0xff]
  %v127 = vld [vmem:[%s1 + $0x1c0] sm:$0xff]
  %v128 = vld [vmem:[%s1 + $0x1c8] sm:$0xff]
  %v129 = vld [vmem:[%s1 + $0x1d0] sm:$0xff]
  %v130 = vld [vmem:[%s1 + $0x1d8] sm:$0xff]
  %v131 = vld [vmem:[%s1 + $0x1e0] sm:$0xff]
  %v132 = vld [vmem:[%s1 + $0x1e8] sm:$0xff]
  %v133 = vld [vmem:[%s1 + $0x1f0] sm:$0xff]
  %v134 = vld [vmem:[%s1 + $0x1f8] sm:$0xff]
  %v135 = vld [vmem:[%s1 + $0x200] sm:$0xff]
  %v136 = vld [vmem:[%s1 + $0x208] sm:$0xff]
  %v137 = vld [vmem:[%s1 + $0x210] sm:$0xff]
  %v138 = vld [vmem:[%s1 + $0x218] sm:$0xff]
  %v139 = vld [vmem:[%s1 + $0x220] sm:$0xff]
  %v140 = vld [vmem:[%s1 + $0x228] sm:$0xff]
  %v141 = vld [vmem:[%s1 + $0x230] sm:$0xff]
  %v142 = vld [vmem:[%s1 + $0x238] sm:$0xff]
  %v143 = vld [vmem:[%s1 + $0x240] sm:$0xff]
  %v144 = vld [vmem:[%s1 + $0x248] sm:$0xff]
  %v145 = vld [vmem:[%s1 + $0x250] sm:$0xff]
  %v146 = vld [vmem:[%s1 + $0x258] sm:$0xff]
  %v147 = vld [vmem:[%s1 + $0x260] sm:$0xff]
  %v148 = vld [vmem:[%s1 + $0x268] sm:$0xff]
  %v149 = vld [vmem:[%s1 + $0x270] sm:$0xff]
  %v150 = vld [vmem:[%s1 + $0x278] sm:$0xff]
  %v151 = vld [vmem:[%s1 + $0x280] sm:$0xff]
  %v152 = vld [vmem:[%s1 + $0x288] sm:$0xff]
  %v153 = vld [vmem:[%s1 + $0x290] sm:$0xff]
  %v154 = vld [vmem:[%s1 + $0x298] sm:$0xff]
  %v155 = vld [vmem:[%s1 + $0x2a0] sm:$0xff]
  %v156 = vld [vmem:[%s1 + $0x2a8] sm:$0xff]
  %v157 = vld [vmem:[%s1 + $0x2b0] sm:$0xff]
  %v158 = vld [vmem:[%s1 + $0x2b8] sm:$0xff]
  %v159 = vld [vmem:[%s1 + $0x2c0] sm:$0xff]
  %v160 = vld [vmem:[%s1 + $0x2c8] sm:$0xff]
  %v161 = vld [vmem:[%s1 + $0x2d0] sm:$0xff]
  %v162 = vld [vmem:[%s1 + $0x2d8] sm:$0xff]
  %v163 = vld [vmem:[%s1 + $0x2e0] sm:$0xff]
  %v164 = vld [vmem:[%s1 + $0x2e8] sm:$0xff]
  %v165 = vld [vmem:[%s1 + $0x2f0] sm:$0xff]
  %v166 = vld [vmem:[%s1 + $0x2f8] sm:$0xff]
  %v167 = vld [vmem:[%s1 + $0x300] sm:$0xff]
  %v168 = vld [vmem:[%s1 + $0x308] sm:$0xff]
  %v169 = vld [vmem:[%s1 + $0x310] sm:$0xff]
  %v170 = vld [vmem:[%s1 + $0x318] sm:$0xff]
  %v171 = vld [vmem:[%s1 + $0x320] sm:$0xff]
  %v172 = vld [vmem:[%s1 + $0x328] sm:$0xff]
  %v173 = vld [vmem:[%s1 + $0x330] sm:$0xff]
  %v174 = vld [vmem:[%s1 + $0x338] sm:$0xff]
  %v175 = vld [vmem:[%s1 + $0x340] sm:$0xff]
  %v176 = vld [vmem:[%s1 + $0x348] sm:$0xff]
  %v177 = vld [vmem:[%s1 + $0x350] sm:$0xff]
  %v178 = vld [vmem:[%s1 + $0x358] sm:$0xff]
  %v179 = vld [vmem:[%s1 + $0x360] sm:$0xff]
  %v180 = vld [vmem:[%s1 + $0x368] sm:$0xff]
  %v181 = vld [vmem:[%s1 + $0x370] sm:$0xff]
  %v182 = vld [vmem:[%s1 + $0x378] sm:$0xff]
  %v183 = vld [vmem:[%s1 + $0x380] sm:$0xff]
  %v184 = vld [vmem:[%s1 + $0x388] sm:$0xff]
  %v185 = vld [vmem:[%s1 + $0x390] sm:$0xff]
  %v186 = vld [vmem:[%s1 + $0x398] sm:$0xff]
  %v187 = vld [vmem:[%s1 + $0x3a0] sm:$0xff]
  %v188 = vld [vmem:[%s1 + $0x3a8] sm:$0xff]
  %v189 = vld [vmem:[%s1 + $0x3b0] sm:$0xff]
  %v190 = vld [vmem:[%s1 + $0x3b8] sm:$0xff]
  %v191 = vld [vmem:[%s1 + $0x3c0] sm:$0xff]
  %v192 = vld [vmem:[%s1 + $0x3c8] sm:$0xff]
  %v193 = vld [vmem:[%s1 + $0x3d0] sm:$0xff]
  %v194 = vld [vmem:[%s1 + $0x3d8] sm:$0xff]
  %v195 = vld [vmem:[%s1 + $0x3e0] sm:$0xff]
  %v196 = vld [vmem:[%s1 + $0x3e8] sm:$0xff]
  %v197 = vld [vmem:[%s1 + $0x3f0] sm:$0xff]
  %v198 = vld [vmem:[%s1 + $0x3f8] sm:$0xff]
  %v199 = vld [vmem:[%s2] sm:$0xf]
  %v201 = vlaneseq
  %v202 = vshrl.u32 %v201, 7
  %v203 = vsub.s32 0, %v202
  %v204 = vrot.slane %v199, %v203
  %v205 = vlaneseq
  %v206 = vshrl.u32 %v205, 7
  %v207 = vsub.s32 1, %v206
  %v208 = vrot.slane %v199, %v207
  %v209 = vlaneseq
  %v210 = vshrl.u32 %v209, 7
  %v211 = vsub.s32 2, %v210
  %v212 = vrot.slane %v199, %v211
  %v213 = vlaneseq
  %v214 = vshrl.u32 %v213, 7
  %v215 = vsub.s32 3, %v214
  %v216 = vrot.slane %v199, %v215
  %v349 = vunpack.c.l.b16 %v71
  %v350 = vunpack.c.h.b16 %v71
  %v351 = vunpack.c.l.b16 %v72
  %v352 = vunpack.c.h.b16 %v72
  %v353 = vunpack.c.l.b16 %v73
  %v354 = vunpack.c.h.b16 %v73
  %v355 = vunpack.c.l.b16 %v74
  %v356 = vunpack.c.h.b16 %v74
  %v357 = vunpack.c.l.b16 %v75
  %v358 = vunpack.c.h.b16 %v75
  %v359 = vunpack.c.l.b16 %v76
  %v360 = vunpack.c.h.b16 %v76
  %v361 = vunpack.c.l.b16 %v77
  %v362 = vunpack.c.h.b16 %v77
  %v363 = vunpack.c.l.b16 %v78
  %v364 = vunpack.c.h.b16 %v78
  %v365 = vunpack.c.l.b16 %v79
  %v366 = vunpack.c.h.b16 %v79
  %v367 = vunpack.c.l.b16 %v80
  %v368 = vunpack.c.h.b16 %v80
  %v369 = vunpack.c.l.b16 %v81
  %v370 = vunpack.c.h.b16 %v81
  %v371 = vunpack.c.l.b16 %v82
  %v372 = vunpack.c.h.b16 %v82
  %v373 = vunpack.c.l.b16 %v83
  %v374 = vunpack.c.h.b16 %v83
  %v375 = vunpack.c.l.b16 %v84
  %v376 = vunpack.c.h.b16 %v84
  %v377 = vunpack.c.l.b16 %v85
  %v378 = vunpack.c.h.b16 %v85
  %v379 = vunpack.c.l.b16 %v86
  %v380 = vunpack.c.h.b16 %v86
  %v381 = vunpack.c.l.b16 %v87
  %v382 = vunpack.c.h.b16 %v87
  %v383 = vunpack.c.l.b16 %v88
  %v384 = vunpack.c.h.b16 %v88
  %v385 = vunpack.c.l.b16 %v89
  %v386 = vunpack.c.h.b16 %v89
  %v387 = vunpack.c.l.b16 %v90
  %v388 = vunpack.c.h.b16 %v90
  %v389 = vunpack.c.l.b16 %v91
  %v390 = vunpack.c.h.b16 %v91
  %v391 = vunpack.c.l.b16 %v92
  %v392 = vunpack.c.h.b16 %v92
  %v393 = vunpack.c.l.b16 %v93
  %v394 = vunpack.c.h.b16 %v93
  %v395 = vunpack.c.l.b16 %v94
  %v396 = vunpack.c.h.b16 %v94
  %v397 = vunpack.c.l.b16 %v95
  %v398 = vunpack.c.h.b16 %v95
  %v399 = vunpack.c.l.b16 %v96
  %v400 = vunpack.c.h.b16 %v96
  %v401 = vunpack.c.l.b16 %v97
  %v402 = vunpack.c.h.b16 %v97
  %v403 = vunpack.c.l.b16 %v98
  %v404 = vunpack.c.h.b16 %v98
  %v405 = vunpack.c.l.b16 %v99
  %v406 = vunpack.c.h.b16 %v99
  %v407 = vunpack.c.l.b16 %v100
  %v408 = vunpack.c.h.b16 %v100
  %v409 = vunpack.c.l.b16 %v101
  %v410 = vunpack.c.h.b16 %v101
  %v411 = vunpack.c.l.b16 %v102
  %v412 = vunpack.c.h.b16 %v102
  %v413 = vunpack.c.l.b16 %v103
  %v414 = vunpack.c.h.b16 %v103
  %v415 = vunpack.c.l.b16 %v104
  %v416 = vunpack.c.h.b16 %v104
  %v417 = vunpack.c.l.b16 %v105
  %v418 = vunpack.c.h.b16 %v105
  %v419 = vunpack.c.l.b16 %v106
  %v420 = vunpack.c.h.b16 %v106
  %v421 = vunpack.c.l.b16 %v107
  %v422 = vunpack.c.h.b16 %v107
  %v423 = vunpack.c.l.b16 %v108
  %v424 = vunpack.c.h.b16 %v108
  %v425 = vunpack.c.l.b16 %v109
  %v426 = vunpack.c.h.b16 %v109
  %v427 = vunpack.c.l.b16 %v110
  %v428 = vunpack.c.h.b16 %v110
  %v429 = vunpack.c.l.b16 %v111
  %v430 = vunpack.c.h.b16 %v111
  %v431 = vunpack.c.l.b16 %v112
  %v432 = vunpack.c.h.b16 %v112
  %v433 = vunpack.c.l.b16 %v113
  %v434 = vunpack.c.h.b16 %v113
  %v435 = vunpack.c.l.b16 %v114
  %v436 = vunpack.c.h.b16 %v114
  %v437 = vunpack.c.l.b16 %v115
  %v438 = vunpack.c.h.b16 %v115
  %v439 = vunpack.c.l.b16 %v116
  %v440 = vunpack.c.h.b16 %v116
  %v441 = vunpack.c.l.b16 %v117
  %v442 = vunpack.c.h.b16 %v117
  %v443 = vunpack.c.l.b16 %v118
  %v444 = vunpack.c.h.b16 %v118
  %v445 = vunpack.c.l.b16 %v119
  %v446 = vunpack.c.h.b16 %v119
  %v447 = vunpack.c.l.b16 %v120
  %v448 = vunpack.c.h.b16 %v120
  %v449 = vunpack.c.l.b16 %v121
  %v450 = vunpack.c.h.b16 %v121
  %v451 = vunpack.c.l.b16 %v122
  %v452 = vunpack.c.h.b16 %v122
  %v453 = vunpack.c.l.b16 %v123
  %v454 = vunpack.c.h.b16 %v123
  %v455 = vunpack.c.l.b16 %v124
  %v456 = vunpack.c.h.b16 %v124
  %v457 = vunpack.c.l.b16 %v125
  %v458 = vunpack.c.h.b16 %v125
  %v459 = vunpack.c.l.b16 %v126
  %v460 = vunpack.c.h.b16 %v126
  %v461 = vunpack.c.l.b16 %v127
  %v462 = vunpack.c.h.b16 %v127
  %v463 = vunpack.c.l.b16 %v128
  %v464 = vunpack.c.h.b16 %v128
  %v465 = vunpack.c.l.b16 %v129
  %v466 = vunpack.c.h.b16 %v129
  %v467 = vunpack.c.l.b16 %v130
  %v468 = vunpack.c.h.b16 %v130
  %v469 = vunpack.c.l.b16 %v131
  %v470 = vunpack.c.h.b16 %v131
  %v471 = vunpack.c.l.b16 %v132
  %v472 = vunpack.c.h.b16 %v132
  %v473 = vunpack.c.l.b16 %v133
  %v474 = vunpack.c.h.b16 %v133
  %v475 = vunpack.c.l.b16 %v134
  %v476 = vunpack.c.h.b16 %v134
  %v477 = vunpack.c.l.b16 %v135
  %v478 = vunpack.c.h.b16 %v135
  %v479 = vunpack.c.l.b16 %v136
  %v480 = vunpack.c.h.b16 %v136
  %v481 = vunpack.c.l.b16 %v137
  %v482 = vunpack.c.h.b16 %v137
  %v483 = vunpack.c.l.b16 %v138
  %v484 = vunpack.c.h.b16 %v138
  %v485 = vunpack.c.l.b16 %v139
  %v486 = vunpack.c.h.b16 %v139
  %v487 = vunpack.c.l.b16 %v140
  %v488 = vunpack.c.h.b16 %v140
  %v489 = vunpack.c.l.b16 %v141
  %v490 = vunpack.c.h.b16 %v141
  %v491 = vunpack.c.l.b16 %v142
  %v492 = vunpack.c.h.b16 %v142
  %v493 = vunpack.c.l.b16 %v143
  %v494 = vunpack.c.h.b16 %v143
  %v495 = vunpack.c.l.b16 %v144
  %v496 = vunpack.c.h.b16 %v144
  %v497 = vunpack.c.l.b16 %v145
  %v498 = vunpack.c.h.b16 %v145
  %v499 = vunpack.c.l.b16 %v146
  %v500 = vunpack.c.h.b16 %v146
  %v501 = vunpack.c.l.b16 %v147
  %v502 = vunpack.c.h.b16 %v147
  %v503 = vunpack.c.l.b16 %v148
  %v504 = vunpack.c.h.b16 %v148
  %v505 = vunpack.c.l.b16 %v149
  %v506 = vunpack.c.h.b16 %v149
  %v507 = vunpack.c.l.b16 %v150
  %v508 = vunpack.c.h.b16 %v150
  %v509 = vunpack.c.l.b16 %v151
  %v510 = vunpack.c.h.b16 %v151
  %v511 = vunpack.c.l.b16 %v152
  %v512 = vunpack.c.h.b16 %v152
  %v513 = vunpack.c.l.b16 %v153
  %v514 = vunpack.c.h.b16 %v153
  %v515 = vunpack.c.l.b16 %v154
  %v516 = vunpack.c.h.b16 %v154
  %v517 = vunpack.c.l.b16 %v155
  %v518 = vunpack.c.h.b16 %v155
  %v519 = vunpack.c.l.b16 %v156
  %v520 = vunpack.c.h.b16 %v156
  %v521 = vunpack.c.l.b16 %v157
  %v522 = vunpack.c.h.b16 %v157
  %v523 = vunpack.c.l.b16 %v158
  %v524 = vunpack.c.h.b16 %v158
  %v525 = vunpack.c.l.b16 %v159
  %v526 = vunpack.c.h.b16 %v159
  %v527 = vunpack.c.l.b16 %v160
  %v528 = vunpack.c.h.b16 %v160
  %v529 = vunpack.c.l.b16 %v161
  %v530 = vunpack.c.h.b16 %v161
  %v531 = vunpack.c.l.b16 %v162
  %v532 = vunpack.c.h.b16 %v162
  %v533 = vunpack.c.l.b16 %v163
  %v534 = vunpack.c.h.b16 %v163
  %v535 = vunpack.c.l.b16 %v164
  %v536 = vunpack.c.h.b16 %v164
  %v537 = vunpack.c.l.b16 %v165
  %v538 = vunpack.c.h.b16 %v165
  %v539 = vunpack.c.l.b16 %v166
  %v540 = vunpack.c.h.b16 %v166
  %v541 = vunpack.c.l.b16 %v167
  %v542 = vunpack.c.h.b16 %v167
  %v543 = vunpack.c.l.b16 %v168
  %v544 = vunpack.c.h.b16 %v168
  %v545 = vunpack.c.l.b16 %v169
  %v546 = vunpack.c.h.b16 %v169
  %v547 = vunpack.c.l.b16 %v170
  %v548 = vunpack.c.h.b16 %v170
  %v549 = vunpack.c.l.b16 %v171
  %v550 = vunpack.c.h.b16 %v171
  %v551 = vunpack.c.l.b16 %v172
  %v552 = vunpack.c.h.b16 %v172
  %v553 = vunpack.c.l.b16 %v173
  %v554 = vunpack.c.h.b16 %v173
  %v555 = vunpack.c.l.b16 %v174
  %v556 = vunpack.c.h.b16 %v174
  %v557 = vunpack.c.l.b16 %v175
  %v558 = vunpack.c.h.b16 %v175
  %v559 = vunpack.c.l.b16 %v176
  %v560 = vunpack.c.h.b16 %v176
  %v561 = vunpack.c.l.b16 %v177
  %v562 = vunpack.c.h.b16 %v177
  %v563 = vunpack.c.l.b16 %v178
  %v564 = vunpack.c.h.b16 %v178
  %v565 = vunpack.c.l.b16 %v179
  %v566 = vunpack.c.h.b16 %v179
  %v567 = vunpack.c.l.b16 %v180
  %v568 = vunpack.c.h.b16 %v180
  %v569 = vunpack.c.l.b16 %v181
  %v570 = vunpack.c.h.b16 %v181
  %v571 = vunpack.c.l.b16 %v182
  %v572 = vunpack.c.h.b16 %v182
  %v573 = vunpack.c.l.b16 %v183
  %v574 = vunpack.c.h.b16 %v183
  %v575 = vunpack.c.l.b16 %v184
  %v576 = vunpack.c.h.b16 %v184
  %v577 = vunpack.c.l.b16 %v185
  %v578 = vunpack.c.h.b16 %v185
  %v579 = vunpack.c.l.b16 %v186
  %v580 = vunpack.c.h.b16 %v186
  %v581 = vunpack.c.l.b16 %v187
  %v582 = vunpack.c.h.b16 %v187
  %v583 = vunpack.c.l.b16 %v188
  %v584 = vunpack.c.h.b16 %v188
  %v585 = vunpack.c.l.b16 %v189
  %v586 = vunpack.c.h.b16 %v189
  %v587 = vunpack.c.l.b16 %v190
  %v588 = vunpack.c.h.b16 %v190
  %v589 = vunpack.c.l.b16 %v191
  %v590 = vunpack.c.h.b16 %v191
  %v591 = vunpack.c.l.b16 %v192
  %v592 = vunpack.c.h.b16 %v192
  %v593 = vunpack.c.l.b16 %v193
  %v594 = vunpack.c.h.b16 %v193
  %v595 = vunpack.c.l.b16 %v194
  %v596 = vunpack.c.h.b16 %v194
  %v597 = vunpack.c.l.b16 %v195
  %v598 = vunpack.c.h.b16 %v195
  %v599 = vunpack.c.l.b16 %v196
  %v600 = vunpack.c.h.b16 %v196
  %v601 = vunpack.c.l.b16 %v197
  %v602 = vunpack.c.h.b16 %v197
  %v603 = vunpack.c.l.b16 %v198
  %v604 = vunpack.c.h.b16 %v198
  %v605 = vpack.c.b16 %v353, %v349
  %v606 = vpack.c.b16 %v354, %v350
  %v607 = vpack.c.b16 %v355, %v351
  %v608 = vpack.c.b16 %v356, %v352
  %v609 = vpack.c.b16 %v361, %v357
  %v610 = vpack.c.b16 %v362, %v358
  %v611 = vpack.c.b16 %v363, %v359
  %v612 = vpack.c.b16 %v364, %v360
  %v613 = vpack.c.b16 %v369, %v365
  %v614 = vpack.c.b16 %v370, %v366
  %v615 = vpack.c.b16 %v371, %v367
  %v616 = vpack.c.b16 %v372, %v368
  %v617 = vpack.c.b16 %v377, %v373
  %v618 = vpack.c.b16 %v378, %v374
  %v619 = vpack.c.b16 %v379, %v375
  %v620 = vpack.c.b16 %v380, %v376
  %v621 = vpack.c.b16 %v385, %v381
  %v622 = vpack.c.b16 %v386, %v382
  %v623 = vpack.c.b16 %v387, %v383
  %v624 = vpack.c.b16 %v388, %v384
  %v625 = vpack.c.b16 %v393, %v389
  %v626 = vpack.c.b16 %v394, %v390
  %v627 = vpack.c.b16 %v395, %v391
  %v628 = vpack.c.b16 %v396, %v392
  %v629 = vpack.c.b16 %v401, %v397
  %v630 = vpack.c.b16 %v402, %v398
  %v631 = vpack.c.b16 %v403, %v399
  %v632 = vpack.c.b16 %v404, %v400
  %v633 = vpack.c.b16 %v409, %v405
  %v634 = vpack.c.b16 %v410, %v406
  %v635 = vpack.c.b16 %v411, %v407
  %v636 = vpack.c.b16 %v412, %v408
  %v637 = vpack.c.b16 %v417, %v413
  %v638 = vpack.c.b16 %v418, %v414
  %v639 = vpack.c.b16 %v419, %v415
  %v640 = vpack.c.b16 %v420, %v416
  %v641 = vpack.c.b16 %v425, %v421
  %v642 = vpack.c.b16 %v426, %v422
  %v643 = vpack.c.b16 %v427, %v423
  %v644 = vpack.c.b16 %v428, %v424
  %v645 = vpack.c.b16 %v433, %v429
  %v646 = vpack.c.b16 %v434, %v430
  %v647 = vpack.c.b16 %v435, %v431
  %v648 = vpack.c.b16 %v436, %v432
  %v649 = vpack.c.b16 %v441, %v437
  %v650 = vpack.c.b16 %v442, %v438
  %v651 = vpack.c.b16 %v443, %v439
  %v652 = vpack.c.b16 %v444, %v440
  %v653 = vpack.c.b16 %v449, %v445
  %v654 = vpack.c.b16 %v450, %v446
  %v655 = vpack.c.b16 %v451, %v447
  %v656 = vpack.c.b16 %v452, %v448
  %v657 = vpack.c.b16 %v457, %v453
  %v658 = vpack.c.b16 %v458, %v454
  %v659 = vpack.c.b16 %v459, %v455
  %v660 = vpack.c.b16 %v460, %v456
  %v661 = vpack.c.b16 %v465, %v461
  %v662 = vpack.c.b16 %v466, %v462
  %v663 = vpack.c.b16 %v467, %v463
  %v664 = vpack.c.b16 %v468, %v464
  %v665 = vpack.c.b16 %v473, %v469
  %v666 = vpack.c.b16 %v474, %v470
  %v667 = vpack.c.b16 %v475, %v471
  %v668 = vpack.c.b16 %v476, %v472
  %v669 = vpack.c.b16 %v481, %v477
  %v670 = vpack.c.b16 %v482, %v478
  %v671 = vpack.c.b16 %v483, %v479
  %v672 = vpack.c.b16 %v484, %v480
  %v673 = vpack.c.b16 %v489, %v485
  %v674 = vpack.c.b16 %v490, %v486
  %v675 = vpack.c.b16 %v491, %v487
  %v676 = vpack.c.b16 %v492, %v488
  %v677 = vpack.c.b16 %v497, %v493
  %v678 = vpack.c.b16 %v498, %v494
  %v679 = vpack.c.b16 %v499, %v495
  %v680 = vpack.c.b16 %v500, %v496
  %v681 = vpack.c.b16 %v505, %v501
  %v682 = vpack.c.b16 %v506, %v502
  %v683 = vpack.c.b16 %v507, %v503
  %v684 = vpack.c.b16 %v508, %v504
  %v685 = vpack.c.b16 %v513, %v509
  %v686 = vpack.c.b16 %v514, %v510
  %v687 = vpack.c.b16 %v515, %v511
  %v688 = vpack.c.b16 %v516, %v512
  %v689 = vpack.c.b16 %v521, %v517
  %v690 = vpack.c.b16 %v522, %v518
  %v691 = vpack.c.b16 %v523, %v519
  %v692 = vpack.c.b16 %v524, %v520
  %v693 = vpack.c.b16 %v529, %v525
  %v694 = vpack.c.b16 %v530, %v526
  %v695 = vpack.c.b16 %v531, %v527
  %v696 = vpack.c.b16 %v532, %v528
  %v697 = vpack.c.b16 %v537, %v533
  %v698 = vpack.c.b16 %v538, %v534
  %v699 = vpack.c.b16 %v539, %v535
  %v700 = vpack.c.b16 %v540, %v536
  %v701 = vpack.c.b16 %v545, %v541
  %v702 = vpack.c.b16 %v546, %v542
  %v703 = vpack.c.b16 %v547, %v543
  %v704 = vpack.c.b16 %v548, %v544
  %v705 = vpack.c.b16 %v553, %v549
  %v706 = vpack.c.b16 %v554, %v550
  %v707 = vpack.c.b16 %v555, %v551
  %v708 = vpack.c.b16 %v556, %v552
  %v709 = vpack.c.b16 %v561, %v557
  %v710 = vpack.c.b16 %v562, %v558
  %v711 = vpack.c.b16 %v563, %v559
  %v712 = vpack.c.b16 %v564, %v560
  %v713 = vpack.c.b16 %v569, %v565
  %v714 = vpack.c.b16 %v570, %v566
  %v715 = vpack.c.b16 %v571, %v567
  %v716 = vpack.c.b16 %v572, %v568
  %v717 = vpack.c.b16 %v577, %v573
  %v718 = vpack.c.b16 %v578, %v574
  %v719 = vpack.c.b16 %v579, %v575
  %v720 = vpack.c.b16 %v580, %v576
  %v721 = vpack.c.b16 %v585, %v581
  %v722 = vpack.c.b16 %v586, %v582
  %v723 = vpack.c.b16 %v587, %v583
  %v724 = vpack.c.b16 %v588, %v584
  %v725 = vpack.c.b16 %v593, %v589
  %v726 = vpack.c.b16 %v594, %v590
  %v727 = vpack.c.b16 %v595, %v591
  %v728 = vpack.c.b16 %v596, %v592
  %v729 = vpack.c.b16 %v601, %v597
  %v730 = vpack.c.b16 %v602, %v598
  %v731 = vpack.c.b16 %v603, %v599
  %v732 = vpack.c.b16 %v604, %v600
  %861 = vmatprep.subr.bf16.mxu0 %v634
  %862 = vmatpush1.bf16.msra.mxu0 %v633
  %863 = vmatprep.subr.bf16.mxu0 %v630
  %864 = vmatpush1.bf16.msra.mxu0 %v629
  %865 = vmatprep.subr.bf16.mxu0 %v626
  %866 = vmatpush1.bf16.msra.mxu0 %v625
  %867 = vmatprep.subr.bf16.mxu0 %v622
  %868 = vmatpush1.bf16.msra.mxu0 %v621
  %869 = vmatprep.subr.bf16.mxu0 %v618
  %870 = vmatpush1.bf16.msra.mxu0 %v617
  %871 = vmatprep.subr.bf16.mxu0 %v614
  %872 = vmatpush1.bf16.msra.mxu0 %v613
  %873 = vmatprep.subr.bf16.mxu0 %v610
  %874 = vmatpush1.bf16.msra.mxu0 %v609
  %875 = vmatprep.subr.bf16.mxu0 %v606
  %876 = vmatpush1.bf16.msra.mxu0 %v605
  %877 = vmatprep.subr.bf16.mxu0 %v666
  %878 = vmatpush2.bf16.msra.mxu0 %v665
  %879 = vmatprep.subr.bf16.mxu0 %v662
  %880 = vmatpush2.bf16.msra.mxu0 %v661
  %881 = vmatprep.subr.bf16.mxu0 %v658
  %882 = vmatpush2.bf16.msra.mxu0 %v657
  %883 = vmatprep.subr.bf16.mxu0 %v654
  %884 = vmatpush2.bf16.msra.mxu0 %v653
  %885 = vmatprep.subr.bf16.mxu0 %v650
  %886 = vmatpush2.bf16.msra.mxu0 %v649
  %887 = vmatprep.subr.bf16.mxu0 %v646
  %888 = vmatpush2.bf16.msra.mxu0 %v645
  %889 = vmatprep.subr.bf16.mxu0 %v642
  %890 = vmatpush2.bf16.msra.mxu0 %v641
  %891 = vmatprep.subr.bf16.mxu0 %v638
  %892 = vmatpush2.bf16.msra.mxu0 %v637
  %893 = vmatprep.mubr.bf16.mxu0 %v64
  %894 = vmatmul.mubr.bf16.gmra.mxu0 %v63
  %v895 = vpop.f32.mrf.mxu0
  %v896 = vadd.f32 %v204, %v895
  %v897 = vpop.f32.mrf.mxu0
  %v898 = vadd.f32 %v208, %v897
  %v899 = vpop.f32.mrf.mxu0
  %v900 = vadd.f32 %v204, %v899
  %v901 = vpop.f32.mrf.mxu0
  %v902 = vadd.f32 %v208, %v901
  %903 = vmatprep.mubr.bf16.mxu0 %v68
  %904 = vmatmul.mubr.bf16.gmra.mxu0 %v67
  %v905 = vpop.f32.mrf.mxu0
  %v906 = vadd.f32 %v204, %v905
  %v907 = vpop.f32.mrf.mxu0
  %v908 = vadd.f32 %v208, %v907
  %v909 = vpop.f32.mrf.mxu0
  %v910 = vadd.f32 %v204, %v909
  %v911 = vpop.f32.mrf.mxu0
  %v912 = vadd.f32 %v208, %v911
  %913 = vdwg.mxu0
  %914 = vmatprep.subr.bf16.mxu0 %v698
  %915 = vmatpush1.bf16.msra.mxu0 %v697
  %916 = vmatprep.subr.bf16.mxu0 %v694
  %917 = vmatpush1.bf16.msra.mxu0 %v693
  %918 = vmatprep.subr.bf16.mxu0 %v690
  %919 = vmatpush1.bf16.msra.mxu0 %v689
  %920 = vmatprep.subr.bf16.mxu0 %v686
  %921 = vmatpush1.bf16.msra.mxu0 %v685
  %922 = vmatprep.subr.bf16.mxu0 %v682
  %923 = vmatpush1.bf16.msra.mxu0 %v681
  %924 = vmatprep.subr.bf16.mxu0 %v678
  %925 = vmatpush1.bf16.msra.mxu0 %v677
  %926 = vmatprep.subr.bf16.mxu0 %v674
  %927 = vmatpush1.bf16.msra.mxu0 %v673
  %928 = vmatprep.subr.bf16.mxu0 %v670
  %929 = vmatpush1.bf16.msra.mxu0 %v669
  %930 = vmatprep.subr.bf16.mxu0 %v730
  %931 = vmatpush2.bf16.msra.mxu0 %v729
  %932 = vmatprep.subr.bf16.mxu0 %v726
  %933 = vmatpush2.bf16.msra.mxu0 %v725
  %934 = vmatprep.subr.bf16.mxu0 %v722
  %935 = vmatpush2.bf16.msra.mxu0 %v721
  %936 = vmatprep.subr.bf16.mxu0 %v718
  %937 = vmatpush2.bf16.msra.mxu0 %v717
  %938 = vmatprep.subr.bf16.mxu0 %v714
  %939 = vmatpush2.bf16.msra.mxu0 %v713
  %940 = vmatprep.subr.bf16.mxu0 %v710
  %941 = vmatpush2.bf16.msra.mxu0 %v709
  %942 = vmatprep.subr.bf16.mxu0 %v706
  %943 = vmatpush2.bf16.msra.mxu0 %v705
  %944 = vmatprep.subr.bf16.mxu0 %v702
  %945 = vmatpush2.bf16.msra.mxu0 %v701
  %946 = vmatprep.mubr.bf16.mxu0 %v66
  %947 = vmatmul.mubr.bf16.gmra.mxu0 %v65
  %v948 = vpop.f32.mrf.mxu0
  %v949 = vadd.f32 %v896, %v948
  %v950 = vpop.f32.mrf.mxu0
  %v951 = vadd.f32 %v898, %v950
  %v952 = vpop.f32.mrf.mxu0
  %v953 = vadd.f32 %v900, %v952
  %v954 = vpop.f32.mrf.mxu0
  %v955 = vadd.f32 %v902, %v954
  %956 = vmatprep.mubr.bf16.mxu0 %v70
  %957 = vmatmul.mubr.bf16.gmra.mxu0 %v69
  %v958 = vpop.f32.mrf.mxu0
  %v959 = vadd.f32 %v906, %v958
  %v960 = vpop.f32.mrf.mxu0
  %v961 = vadd.f32 %v908, %v960
  %v962 = vpop.f32.mrf.mxu0
  %v963 = vadd.f32 %v910, %v962
  %v964 = vpop.f32.mrf.mxu0
  %v965 = vadd.f32 %v912, %v964
  %966 = vdwg.mxu0
  %967 = vmatprep.subr.bf16.mxu0 %v636
  %968 = vmatpush1.bf16.msra.mxu0 %v635
  %969 = vmatprep.subr.bf16.mxu0 %v632
  %970 = vmatpush1.bf16.msra.mxu0 %v631
  %971 = vmatprep.subr.bf16.mxu0 %v628
  %972 = vmatpush1.bf16.msra.mxu0 %v627
  %973 = vmatprep.subr.bf16.mxu0 %v624
  %974 = vmatpush1.bf16.msra.mxu0 %v623
  %975 = vmatprep.subr.bf16.mxu0 %v620
  %976 = vmatpush1.bf16.msra.mxu0 %v619
  %977 = vmatprep.subr.bf16.mxu0 %v616
  %978 = vmatpush1.bf16.msra.mxu0 %v615
  %979 = vmatprep.subr.bf16.mxu0 %v612
  %980 = vmatpush1.bf16.msra.mxu0 %v611
  %981 = vmatprep.subr.bf16.mxu0 %v608
  %982 = vmatpush1.bf16.msra.mxu0 %v607
  %983 = vmatprep.subr.bf16.mxu0 %v668
  %984 = vmatpush2.bf16.msra.mxu0 %v667
  %985 = vmatprep.subr.bf16.mxu0 %v664
  %986 = vmatpush2.bf16.msra.mxu0 %v663
  %987 = vmatprep.subr.bf16.mxu0 %v660
  %988 = vmatpush2.bf16.msra.mxu0 %v659
  %989 = vmatprep.subr.bf16.mxu0 %v656
  %990 = vmatpush2.bf16.msra.mxu0 %v655
  %991 = vmatprep.subr.bf16.mxu0 %v652
  %992 = vmatpush2.bf16.msra.mxu0 %v651
  %993 = vmatprep.subr.bf16.mxu0 %v648
  %994 = vmatpush2.bf16.msra.mxu0 %v647
  %995 = vmatprep.subr.bf16.mxu0 %v644
  %996 = vmatpush2.bf16.msra.mxu0 %v643
  %997 = vmatprep.subr.bf16.mxu0 %v640
  %998 = vmatpush2.bf16.msra.mxu0 %v639
  %999 = vmatprep.mubr.bf16.mxu0 %v64
  %1000 = vmatmul.mubr.bf16.gmra.mxu0 %v63
  %v1001 = vpop.f32.mrf.mxu0
  %v1002 = vadd.f32 %v212, %v1001
  %v1003 = vpop.f32.mrf.mxu0
  %v1004 = vadd.f32 %v216, %v1003
  %v1005 = vpop.f32.mrf.mxu0
  %v1006 = vadd.f32 %v212, %v1005
  %v1007 = vpop.f32.mrf.mxu0
  %v1008 = vadd.f32 %v216, %v1007
  %1009 = vmatprep.mubr.bf16.mxu0 %v68
  %1010 = vmatmul.mubr.bf16.gmra.mxu0 %v67
  %v1011 = vpop.f32.mrf.mxu0
  %v1012 = vadd.f32 %v212, %v1011
  %v1013 = vpop.f32.mrf.mxu0
  %v1014 = vadd.f32 %v216, %v1013
  %v1015 = vpop.f32.mrf.mxu0
  %v1016 = vadd.f32 %v212, %v1015
  %v1017 = vpop.f32.mrf.mxu0
  %v1018 = vadd.f32 %v216, %v1017
  %1019 = vdwg.mxu0
  %1020 = vmatprep.subr.bf16.mxu0 %v700
  %1021 = vmatpush1.bf16.msra.mxu0 %v699
  %1022 = vmatprep.subr.bf16.mxu0 %v696
  %1023 = vmatpush1.bf16.msra.mxu0 %v695
  %1024 = vmatprep.subr.bf16.mxu0 %v692
  %1025 = vmatpush1.bf16.msra.mxu0 %v691
  %1026 = vmatprep.subr.bf16.mxu0 %v688
  %1027 = vmatpush1.bf16.msra.mxu0 %v687
  %1028 = vmatprep.subr.bf16.mxu0 %v684
  %1029 = vmatpush1.bf16.msra.mxu0 %v683
  %1030 = vmatprep.subr.bf16.mxu0 %v680
  %1031 = vmatpush1.bf16.msra.mxu0 %v679
  %1032 = vmatprep.subr.bf16.mxu0 %v676
  %1033 = vmatpush1.bf16.msra.mxu0 %v675
  %1034 = vmatprep.subr.bf16.mxu0 %v672
  %1035 = vmatpush1.bf16.msra.mxu0 %v671
  %1036 = vmatprep.subr.bf16.mxu0 %v732
  %1037 = vmatpush2.bf16.msra.mxu0 %v731
  %1038 = vmatprep.subr.bf16.mxu0 %v728
  %1039 = vmatpush2.bf16.msra.mxu0 %v727
  %1040 = vmatprep.subr.bf16.mxu0 %v724
  %1041 = vmatpush2.bf16.msra.mxu0 %v723
  %1042 = vmatprep.subr.bf16.mxu0 %v720
  %1043 = vmatpush2.bf16.msra.mxu0 %v719
  %1044 = vmatprep.subr.bf16.mxu0 %v716
  %1045 = vmatpush2.bf16.msra.mxu0 %v715
  %1046 = vmatprep.subr.bf16.mxu0 %v712
  %1047 = vmatpush2.bf16.msra.mxu0 %v711
  %1048 = vmatprep.subr.bf16.mxu0 %v708
  %1049 = vmatpush2.bf16.msra.mxu0 %v707
  %1050 = vmatprep.subr.bf16.mxu0 %v704
  %1051 = vmatpush2.bf16.msra.mxu0 %v703
  %1052 = vmatprep.mubr.bf16.mxu0 %v66
  %1053 = vmatmul.mubr.bf16.gmra.mxu0 %v65
  %v1054 = vpop.f32.mrf.mxu0
  %v1055 = vadd.f32 %v1002, %v1054
  %v1056 = vpop.f32.mrf.mxu0
  %v1057 = vadd.f32 %v1004, %v1056
  %v1058 = vpop.f32.mrf.mxu0
  %v1059 = vadd.f32 %v1006, %v1058
  %v1060 = vpop.f32.mrf.mxu0
  %v1061 = vadd.f32 %v1008, %v1060
  %1062 = vmatprep.mubr.bf16.mxu0 %v70
  %1063 = vmatmul.mubr.bf16.gmra.mxu0 %v69
  %v1064 = vpop.f32.mrf.mxu0
  %v1065 = vadd.f32 %v1012, %v1064
  %v1066 = vpop.f32.mrf.mxu0
  %v1067 = vadd.f32 %v1014, %v1066
  %v1068 = vpop.f32.mrf.mxu0
  %v1069 = vadd.f32 %v1016, %v1068
  %v1070 = vpop.f32.mrf.mxu0
  %v1071 = vadd.f32 %v1018, %v1070
  %1072 = vdwg.mxu0
  %v1073 = vmax.f32 %v949, 0.0
  %v1074 = vmax.f32 %v951, 0.0
  %v1075 = vmax.f32 %v1055, 0.0
  %v1076 = vmax.f32 %v1057, 0.0
  %v1077 = vmax.f32 %v953, 0.0
  %v1078 = vmax.f32 %v955, 0.0
  %v1079 = vmax.f32 %v1059, 0.0
  %v1080 = vmax.f32 %v1061, 0.0
  %v1081 = vmax.f32 %v959, 0.0
  %v1082 = vmax.f32 %v961, 0.0
  %v1083 = vmax.f32 %v1065, 0.0
  %v1084 = vmax.f32 %v1067, 0.0
  %v1085 = vmax.f32 %v963, 0.0
  %v1086 = vmax.f32 %v965, 0.0
  %v1087 = vmax.f32 %v1069, 0.0
  %v1088 = vmax.f32 %v1071, 0.0
  %v1089 = vpack.c.bf16 %v1077, %v1073
  %v1090 = vpack.c.bf16 %v1078, %v1074
  %v1091 = vpack.c.bf16 %v1079, %v1075
  %v1092 = vpack.c.bf16 %v1080, %v1076
  %v1093 = vpack.c.bf16 %v1085, %v1081
  %v1094 = vpack.c.bf16 %v1086, %v1082
  %v1095 = vpack.c.bf16 %v1087, %v1083
  %v1096 = vpack.c.bf16 %v1088, %v1084
  %v1097 = vld [vmem:[%s3] sm:$0xff]
  %v1098 = vld [vmem:[%s3 + $0x8] sm:$0xf]
  %v1099 = vld [vmem:[%s3 + $0xc] sm:$0xff]
  %v1100 = vld [vmem:[%s3 + $0x14] sm:$0xf]
  %v1101 = vld [vmem:[%s3 + $0x18] sm:$0xff]
  %v1102 = vld [vmem:[%s3 + $0x20] sm:$0xf]
  %v1103 = vld [vmem:[%s3 + $0x24] sm:$0xff]
  %v1104 = vld [vmem:[%s3 + $0x2c] sm:$0xf]
  %v1105 = vld [vmem:[%s3 + $0x30] sm:$0xff]
  %v1106 = vld [vmem:[%s3 + $0x38] sm:$0xf]
  %v1107 = vld [vmem:[%s3 + $0x3c] sm:$0xff]
  %v1108 = vld [vmem:[%s3 + $0x44] sm:$0xf]
  %v1109 = vld [vmem:[%s3 + $0x48] sm:$0xff]
  %v1110 = vld [vmem:[%s3 + $0x50] sm:$0xf]
  %v1111 = vld [vmem:[%s3 + $0x54] sm:$0xff]
  %v1112 = vld [vmem:[%s3 + $0x5c] sm:$0xf]
  %v1113 = vld [vmem:[%s3 + $0x60] sm:$0xff]
  %v1114 = vld [vmem:[%s3 + $0x68] sm:$0xf]
  %v1115 = vld [vmem:[%s3 + $0x6c] sm:$0xff]
  %v1116 = vld [vmem:[%s3 + $0x74] sm:$0xf]
  %v1117 = vld [vmem:[%s3 + $0x78] sm:$0xff]
  %v1118 = vld [vmem:[%s3 + $0x80] sm:$0xf]
  %v1119 = vld [vmem:[%s3 + $0x84] sm:$0xff]
  %v1120 = vld [vmem:[%s3 + $0x8c] sm:$0xf]
  %v1121 = vld [vmem:[%s3 + $0x90] sm:$0xff]
  %v1122 = vld [vmem:[%s3 + $0x98] sm:$0xf]
  %v1123 = vld [vmem:[%s3 + $0x9c] sm:$0xff]
  %v1124 = vld [vmem:[%s3 + $0xa4] sm:$0xf]
  %v1125 = vld [vmem:[%s3 + $0xa8] sm:$0xff]
  %v1126 = vld [vmem:[%s3 + $0xb0] sm:$0xf]
  %v1127 = vld [vmem:[%s3 + $0xb4] sm:$0xff]
  %v1128 = vld [vmem:[%s3 + $0xbc] sm:$0xf]
  %v1129 = vld [vmem:[%s3 + $0xc0] sm:$0xff]
  %v1130 = vld [vmem:[%s3 + $0xc8] sm:$0xf]
  %v1131 = vld [vmem:[%s3 + $0xcc] sm:$0xff]
  %v1132 = vld [vmem:[%s3 + $0xd4] sm:$0xf]
  %v1133 = vld [vmem:[%s3 + $0xd8] sm:$0xff]
  %v1134 = vld [vmem:[%s3 + $0xe0] sm:$0xf]
  %v1135 = vld [vmem:[%s3 + $0xe4] sm:$0xff]
  %v1136 = vld [vmem:[%s3 + $0xec] sm:$0xf]
  %v1137 = vld [vmem:[%s3 + $0xf0] sm:$0xff]
  %v1138 = vld [vmem:[%s3 + $0xf8] sm:$0xf]
  %v1139 = vld [vmem:[%s3 + $0xfc] sm:$0xff]
  %v1140 = vld [vmem:[%s3 + $0x104] sm:$0xf]
  %v1141 = vld [vmem:[%s3 + $0x108] sm:$0xff]
  %v1142 = vld [vmem:[%s3 + $0x110] sm:$0xf]
  %v1143 = vld [vmem:[%s3 + $0x114] sm:$0xff]
  %v1144 = vld [vmem:[%s3 + $0x11c] sm:$0xf]
  %v1145 = vld [vmem:[%s3 + $0x120] sm:$0xff]
  %v1146 = vld [vmem:[%s3 + $0x128] sm:$0xf]
  %v1147 = vld [vmem:[%s3 + $0x12c] sm:$0xff]
  %v1148 = vld [vmem:[%s3 + $0x134] sm:$0xf]
  %v1149 = vld [vmem:[%s3 + $0x138] sm:$0xff]
  %v1150 = vld [vmem:[%s3 + $0x140] sm:$0xf]
  %v1151 = vld [vmem:[%s3 + $0x144] sm:$0xff]
  %v1152 = vld [vmem:[%s3 + $0x14c] sm:$0xf]
  %v1153 = vld [vmem:[%s3 + $0x150] sm:$0xff]
  %v1154 = vld [vmem:[%s3 + $0x158] sm:$0xf]
  %v1155 = vld [vmem:[%s3 + $0x15c] sm:$0xff]
  %v1156 = vld [vmem:[%s3 + $0x164] sm:$0xf]
  %v1157 = vld [vmem:[%s3 + $0x168] sm:$0xff]
  %v1158 = vld [vmem:[%s3 + $0x170] sm:$0xf]
  %v1159 = vld [vmem:[%s3 + $0x174] sm:$0xff]
  %v1160 = vld [vmem:[%s3 + $0x17c] sm:$0xf]
  %v1161 = vld [vmem:[%s3 + $0x180] sm:$0xff]
  %v1162 = vld [vmem:[%s3 + $0x188] sm:$0xf]
  %v1163 = vld [vmem:[%s3 + $0x18c] sm:$0xff]
  %v1164 = vld [vmem:[%s3 + $0x194] sm:$0xf]
  %v1165 = vld [vmem:[%s3 + $0x198] sm:$0xff]
  %v1166 = vld [vmem:[%s3 + $0x1a0] sm:$0xf]
  %v1167 = vld [vmem:[%s3 + $0x1a4] sm:$0xff]
  %v1168 = vld [vmem:[%s3 + $0x1ac] sm:$0xf]
  %v1169 = vld [vmem:[%s3 + $0x1b0] sm:$0xff]
  %v1170 = vld [vmem:[%s3 + $0x1b8] sm:$0xf]
  %v1171 = vld [vmem:[%s3 + $0x1bc] sm:$0xff]
  %v1172 = vld [vmem:[%s3 + $0x1c4] sm:$0xf]
  %v1173 = vld [vmem:[%s3 + $0x1c8] sm:$0xff]
  %v1174 = vld [vmem:[%s3 + $0x1d0] sm:$0xf]
  %v1175 = vld [vmem:[%s3 + $0x1d4] sm:$0xff]
  %v1176 = vld [vmem:[%s3 + $0x1dc] sm:$0xf]
  %v1177 = vld [vmem:[%s3 + $0x1e0] sm:$0xff]
  %v1178 = vld [vmem:[%s3 + $0x1e8] sm:$0xf]
  %v1179 = vld [vmem:[%s3 + $0x1ec] sm:$0xff]
  %v1180 = vld [vmem:[%s3 + $0x1f4] sm:$0xf]
  %v1181 = vld [vmem:[%s3 + $0x1f8] sm:$0xff]
  %v1182 = vld [vmem:[%s3 + $0x200] sm:$0xf]
  %v1183 = vld [vmem:[%s3 + $0x204] sm:$0xff]
  %v1184 = vld [vmem:[%s3 + $0x20c] sm:$0xf]
  %v1185 = vld [vmem:[%s3 + $0x210] sm:$0xff]
  %v1186 = vld [vmem:[%s3 + $0x218] sm:$0xf]
  %v1187 = vld [vmem:[%s3 + $0x21c] sm:$0xff]
  %v1188 = vld [vmem:[%s3 + $0x224] sm:$0xf]
  %v1189 = vld [vmem:[%s3 + $0x228] sm:$0xff]
  %v1190 = vld [vmem:[%s3 + $0x230] sm:$0xf]
  %v1191 = vld [vmem:[%s3 + $0x234] sm:$0xff]
  %v1192 = vld [vmem:[%s3 + $0x23c] sm:$0xf]
  %v1193 = vld [vmem:[%s3 + $0x240] sm:$0xff]
  %v1194 = vld [vmem:[%s3 + $0x248] sm:$0xf]
  %v1195 = vld [vmem:[%s3 + $0x24c] sm:$0xff]
  %v1196 = vld [vmem:[%s3 + $0x254] sm:$0xf]
  %v1197 = vld [vmem:[%s3 + $0x258] sm:$0xff]
  %v1198 = vld [vmem:[%s3 + $0x260] sm:$0xf]
  %v1199 = vld [vmem:[%s3 + $0x264] sm:$0xff]
  %v1200 = vld [vmem:[%s3 + $0x26c] sm:$0xf]
  %v1201 = vld [vmem:[%s3 + $0x270] sm:$0xff]
  %v1202 = vld [vmem:[%s3 + $0x278] sm:$0xf]
  %v1203 = vld [vmem:[%s3 + $0x27c] sm:$0xff]
  %v1204 = vld [vmem:[%s3 + $0x284] sm:$0xf]
  %v1205 = vld [vmem:[%s3 + $0x288] sm:$0xff]
  %v1206 = vld [vmem:[%s3 + $0x290] sm:$0xf]
  %v1207 = vld [vmem:[%s3 + $0x294] sm:$0xff]
  %v1208 = vld [vmem:[%s3 + $0x29c] sm:$0xf]
  %v1209 = vld [vmem:[%s3 + $0x2a0] sm:$0xff]
  %v1210 = vld [vmem:[%s3 + $0x2a8] sm:$0xf]
  %v1211 = vld [vmem:[%s3 + $0x2ac] sm:$0xff]
  %v1212 = vld [vmem:[%s3 + $0x2b4] sm:$0xf]
  %v1213 = vld [vmem:[%s3 + $0x2b8] sm:$0xff]
  %v1214 = vld [vmem:[%s3 + $0x2c0] sm:$0xf]
  %v1215 = vld [vmem:[%s3 + $0x2c4] sm:$0xff]
  %v1216 = vld [vmem:[%s3 + $0x2cc] sm:$0xf]
  %v1217 = vld [vmem:[%s3 + $0x2d0] sm:$0xff]
  %v1218 = vld [vmem:[%s3 + $0x2d8] sm:$0xf]
  %v1219 = vld [vmem:[%s3 + $0x2dc] sm:$0xff]
  %v1220 = vld [vmem:[%s3 + $0x2e4] sm:$0xf]
  %v1221 = vld [vmem:[%s3 + $0x2e8] sm:$0xff]
  %v1222 = vld [vmem:[%s3 + $0x2f0] sm:$0xf]
  %v1223 = vld [vmem:[%s3 + $0x2f4] sm:$0xff]
  %v1224 = vld [vmem:[%s3 + $0x2fc] sm:$0xf]
  %v1225 = vld [vmem:[%s4] sm:$0x7]
  %v1227 = vlaneseq
  %v1228 = vshrl.u32 %v1227, 7
  %v1229 = vsub.s32 0, %v1228
  %v1230 = vrot.slane %v1225, %v1229
  %v1231 = vlaneseq
  %v1232 = vshrl.u32 %v1231, 7
  %v1233 = vsub.s32 1, %v1232
  %v1234 = vrot.slane %v1225, %v1233
  %v1235 = vlaneseq
  %v1236 = vshrl.u32 %v1235, 7
  %v1237 = vsub.s32 2, %v1236
  %v1238 = vrot.slane %v1225, %v1237
  %v1370 = vunpack.c.l.b16 %v1097
  %v1371 = vunpack.c.h.b16 %v1097
  %v1372 = vunpack.c.l.b16 %v1098
  %v1373 = vunpack.c.l.b16 %v1099
  %v1374 = vunpack.c.h.b16 %v1099
  %v1375 = vunpack.c.l.b16 %v1100
  %v1376 = vunpack.c.l.b16 %v1101
  %v1377 = vunpack.c.h.b16 %v1101
  %v1378 = vunpack.c.l.b16 %v1102
  %v1379 = vunpack.c.l.b16 %v1103
  %v1380 = vunpack.c.h.b16 %v1103
  %v1381 = vunpack.c.l.b16 %v1104
  %v1382 = vunpack.c.l.b16 %v1105
  %v1383 = vunpack.c.h.b16 %v1105
  %v1384 = vunpack.c.l.b16 %v1106
  %v1385 = vunpack.c.l.b16 %v1107
  %v1386 = vunpack.c.h.b16 %v1107
  %v1387 = vunpack.c.l.b16 %v1108
  %v1388 = vunpack.c.l.b16 %v1109
  %v1389 = vunpack.c.h.b16 %v1109
  %v1390 = vunpack.c.l.b16 %v1110
  %v1391 = vunpack.c.l.b16 %v1111
  %v1392 = vunpack.c.h.b16 %v1111
  %v1393 = vunpack.c.l.b16 %v1112
  %v1394 = vunpack.c.l.b16 %v1113
  %v1395 = vunpack.c.h.b16 %v1113
  %v1396 = vunpack.c.l.b16 %v1114
  %v1397 = vunpack.c.l.b16 %v1115
  %v1398 = vunpack.c.h.b16 %v1115
  %v1399 = vunpack.c.l.b16 %v1116
  %v1400 = vunpack.c.l.b16 %v1117
  %v1401 = vunpack.c.h.b16 %v1117
  %v1402 = vunpack.c.l.b16 %v1118
  %v1403 = vunpack.c.l.b16 %v1119
  %v1404 = vunpack.c.h.b16 %v1119
  %v1405 = vunpack.c.l.b16 %v1120
  %v1406 = vunpack.c.l.b16 %v1121
  %v1407 = vunpack.c.h.b16 %v1121
  %v1408 = vunpack.c.l.b16 %v1122
  %v1409 = vunpack.c.l.b16 %v1123
  %v1410 = vunpack.c.h.b16 %v1123
  %v1411 = vunpack.c.l.b16 %v1124
  %v1412 = vunpack.c.l.b16 %v1125
  %v1413 = vunpack.c.h.b16 %v1125
  %v1414 = vunpack.c.l.b16 %v1126
  %v1415 = vunpack.c.l.b16 %v1127
  %v1416 = vunpack.c.h.b16 %v1127
  %v1417 = vunpack.c.l.b16 %v1128
  %v1418 = vunpack.c.l.b16 %v1129
  %v1419 = vunpack.c.h.b16 %v1129
  %v1420 = vunpack.c.l.b16 %v1130
  %v1421 = vunpack.c.l.b16 %v1131
  %v1422 = vunpack.c.h.b16 %v1131
  %v1423 = vunpack.c.l.b16 %v1132
  %v1424 = vunpack.c.l.b16 %v1133
  %v1425 = vunpack.c.h.b16 %v1133
  %v1426 = vunpack.c.l.b16 %v1134
  %v1427 = vunpack.c.l.b16 %v1135
  %v1428 = vunpack.c.h.b16 %v1135
  %v1429 = vunpack.c.l.b16 %v1136
  %v1430 = vunpack.c.l.b16 %v1137
  %v1431 = vunpack.c.h.b16 %v1137
  %v1432 = vunpack.c.l.b16 %v1138
  %v1433 = vunpack.c.l.b16 %v1139
  %v1434 = vunpack.c.h.b16 %v1139
  %v1435 = vunpack.c.l.b16 %v1140
  %v1436 = vunpack.c.l.b16 %v1141
  %v1437 = vunpack.c.h.b16 %v1141
  %v1438 = vunpack.c.l.b16 %v1142
  %v1439 = vunpack.c.l.b16 %v1143
  %v1440 = vunpack.c.h.b16 %v1143
  %v1441 = vunpack.c.l.b16 %v1144
  %v1442 = vunpack.c.l.b16 %v1145
  %v1443 = vunpack.c.h.b16 %v1145
  %v1444 = vunpack.c.l.b16 %v1146
  %v1445 = vunpack.c.l.b16 %v1147
  %v1446 = vunpack.c.h.b16 %v1147
  %v1447 = vunpack.c.l.b16 %v1148
  %v1448 = vunpack.c.l.b16 %v1149
  %v1449 = vunpack.c.h.b16 %v1149
  %v1450 = vunpack.c.l.b16 %v1150
  %v1451 = vunpack.c.l.b16 %v1151
  %v1452 = vunpack.c.h.b16 %v1151
  %v1453 = vunpack.c.l.b16 %v1152
  %v1454 = vunpack.c.l.b16 %v1153
  %v1455 = vunpack.c.h.b16 %v1153
  %v1456 = vunpack.c.l.b16 %v1154
  %v1457 = vunpack.c.l.b16 %v1155
  %v1458 = vunpack.c.h.b16 %v1155
  %v1459 = vunpack.c.l.b16 %v1156
  %v1460 = vunpack.c.l.b16 %v1157
  %v1461 = vunpack.c.h.b16 %v1157
  %v1462 = vunpack.c.l.b16 %v1158
  %v1463 = vunpack.c.l.b16 %v1159
  %v1464 = vunpack.c.h.b16 %v1159
  %v1465 = vunpack.c.l.b16 %v1160
  %v1466 = vunpack.c.l.b16 %v1161
  %v1467 = vunpack.c.h.b16 %v1161
  %v1468 = vunpack.c.l.b16 %v1162
  %v1469 = vunpack.c.l.b16 %v1163
  %v1470 = vunpack.c.h.b16 %v1163
  %v1471 = vunpack.c.l.b16 %v1164
  %v1472 = vunpack.c.l.b16 %v1165
  %v1473 = vunpack.c.h.b16 %v1165
  %v1474 = vunpack.c.l.b16 %v1166
  %v1475 = vunpack.c.l.b16 %v1167
  %v1476 = vunpack.c.h.b16 %v1167
  %v1477 = vunpack.c.l.b16 %v1168
  %v1478 = vunpack.c.l.b16 %v1169
  %v1479 = vunpack.c.h.b16 %v1169
  %v1480 = vunpack.c.l.b16 %v1170
  %v1481 = vunpack.c.l.b16 %v1171
  %v1482 = vunpack.c.h.b16 %v1171
  %v1483 = vunpack.c.l.b16 %v1172
  %v1484 = vunpack.c.l.b16 %v1173
  %v1485 = vunpack.c.h.b16 %v1173
  %v1486 = vunpack.c.l.b16 %v1174
  %v1487 = vunpack.c.l.b16 %v1175
  %v1488 = vunpack.c.h.b16 %v1175
  %v1489 = vunpack.c.l.b16 %v1176
  %v1490 = vunpack.c.l.b16 %v1177
  %v1491 = vunpack.c.h.b16 %v1177
  %v1492 = vunpack.c.l.b16 %v1178
  %v1493 = vunpack.c.l.b16 %v1179
  %v1494 = vunpack.c.h.b16 %v1179
  %v1495 = vunpack.c.l.b16 %v1180
  %v1496 = vunpack.c.l.b16 %v1181
  %v1497 = vunpack.c.h.b16 %v1181
  %v1498 = vunpack.c.l.b16 %v1182
  %v1499 = vunpack.c.l.b16 %v1183
  %v1500 = vunpack.c.h.b16 %v1183
  %v1501 = vunpack.c.l.b16 %v1184
  %v1502 = vunpack.c.l.b16 %v1185
  %v1503 = vunpack.c.h.b16 %v1185
  %v1504 = vunpack.c.l.b16 %v1186
  %v1505 = vunpack.c.l.b16 %v1187
  %v1506 = vunpack.c.h.b16 %v1187
  %v1507 = vunpack.c.l.b16 %v1188
  %v1508 = vunpack.c.l.b16 %v1189
  %v1509 = vunpack.c.h.b16 %v1189
  %v1510 = vunpack.c.l.b16 %v1190
  %v1511 = vunpack.c.l.b16 %v1191
  %v1512 = vunpack.c.h.b16 %v1191
  %v1513 = vunpack.c.l.b16 %v1192
  %v1514 = vunpack.c.l.b16 %v1193
  %v1515 = vunpack.c.h.b16 %v1193
  %v1516 = vunpack.c.l.b16 %v1194
  %v1517 = vunpack.c.l.b16 %v1195
  %v1518 = vunpack.c.h.b16 %v1195
  %v1519 = vunpack.c.l.b16 %v1196
  %v1520 = vunpack.c.l.b16 %v1197
  %v1521 = vunpack.c.h.b16 %v1197
  %v1522 = vunpack.c.l.b16 %v1198
  %v1523 = vunpack.c.l.b16 %v1199
  %v1524 = vunpack.c.h.b16 %v1199
  %v1525 = vunpack.c.l.b16 %v1200
  %v1526 = vunpack.c.l.b16 %v1201
  %v1527 = vunpack.c.h.b16 %v1201
  %v1528 = vunpack.c.l.b16 %v1202
  %v1529 = vunpack.c.l.b16 %v1203
  %v1530 = vunpack.c.h.b16 %v1203
  %v1531 = vunpack.c.l.b16 %v1204
  %v1532 = vunpack.c.l.b16 %v1205
  %v1533 = vunpack.c.h.b16 %v1205
  %v1534 = vunpack.c.l.b16 %v1206
  %v1535 = vunpack.c.l.b16 %v1207
  %v1536 = vunpack.c.h.b16 %v1207
  %v1537 = vunpack.c.l.b16 %v1208
  %v1538 = vunpack.c.l.b16 %v1209
  %v1539 = vunpack.c.h.b16 %v1209
  %v1540 = vunpack.c.l.b16 %v1210
  %v1541 = vunpack.c.l.b16 %v1211
  %v1542 = vunpack.c.h.b16 %v1211
  %v1543 = vunpack.c.l.b16 %v1212
  %v1544 = vunpack.c.l.b16 %v1213
  %v1545 = vunpack.c.h.b16 %v1213
  %v1546 = vunpack.c.l.b16 %v1214
  %v1547 = vunpack.c.l.b16 %v1215
  %v1548 = vunpack.c.h.b16 %v1215
  %v1549 = vunpack.c.l.b16 %v1216
  %v1550 = vunpack.c.l.b16 %v1217
  %v1551 = vunpack.c.h.b16 %v1217
  %v1552 = vunpack.c.l.b16 %v1218
  %v1553 = vunpack.c.l.b16 %v1219
  %v1554 = vunpack.c.h.b16 %v1219
  %v1555 = vunpack.c.l.b16 %v1220
  %v1556 = vunpack.c.l.b16 %v1221
  %v1557 = vunpack.c.h.b16 %v1221
  %v1558 = vunpack.c.l.b16 %v1222
  %v1559 = vunpack.c.l.b16 %v1223
  %v1560 = vunpack.c.h.b16 %v1223
  %v1561 = vunpack.c.l.b16 %v1224
  %v1562 = vpack.c.b16 %v1373, %v1370
  %v1563 = vpack.c.b16 %v1374, %v1371
  %v1564 = vpack.c.b16 %v1375, %v1372
  %v1565 = vpack.c.b16 %v1379, %v1376
  %v1566 = vpack.c.b16 %v1380, %v1377
  %v1567 = vpack.c.b16 %v1381, %v1378
  %v1568 = vpack.c.b16 %v1385, %v1382
  %v1569 = vpack.c.b16 %v1386, %v1383
  %v1570 = vpack.c.b16 %v1387, %v1384
  %v1571 = vpack.c.b16 %v1391, %v1388
  %v1572 = vpack.c.b16 %v1392, %v1389
  %v1573 = vpack.c.b16 %v1393, %v1390
  %v1574 = vpack.c.b16 %v1397, %v1394
  %v1575 = vpack.c.b16 %v1398, %v1395
  %v1576 = vpack.c.b16 %v1399, %v1396
  %v1577 = vpack.c.b16 %v1403, %v1400
  %v1578 = vpack.c.b16 %v1404, %v1401
  %v1579 = vpack.c.b16 %v1405, %v1402
  %v1580 = vpack.c.b16 %v1409, %v1406
  %v1581 = vpack.c.b16 %v1410, %v1407
  %v1582 = vpack.c.b16 %v1411, %v1408
  %v1583 = vpack.c.b16 %v1415, %v1412
  %v1584 = vpack.c.b16 %v1416, %v1413
  %v1585 = vpack.c.b16 %v1417, %v1414
  %v1586 = vpack.c.b16 %v1421, %v1418
  %v1587 = vpack.c.b16 %v1422, %v1419
  %v1588 = vpack.c.b16 %v1423, %v1420
  %v1589 = vpack.c.b16 %v1427, %v1424
  %v1590 = vpack.c.b16 %v1428, %v1425
  %v1591 = vpack.c.b16 %v1429, %v1426
  %v1592 = vpack.c.b16 %v1433, %v1430
  %v1593 = vpack.c.b16 %v1434, %v1431
  %v1594 = vpack.c.b16 %v1435, %v1432
  %v1595 = vpack.c.b16 %v1439, %v1436
  %v1596 = vpack.c.b16 %v1440, %v1437
  %v1597 = vpack.c.b16 %v1441, %v1438
  %v1598 = vpack.c.b16 %v1445, %v1442
  %v1599 = vpack.c.b16 %v1446, %v1443
  %v1600 = vpack.c.b16 %v1447, %v1444
  %v1601 = vpack.c.b16 %v1451, %v1448
  %v1602 = vpack.c.b16 %v1452, %v1449
  %v1603 = vpack.c.b16 %v1453, %v1450
  %v1604 = vpack.c.b16 %v1457, %v1454
  %v1605 = vpack.c.b16 %v1458, %v1455
  %v1606 = vpack.c.b16 %v1459, %v1456
  %v1607 = vpack.c.b16 %v1463, %v1460
  %v1608 = vpack.c.b16 %v1464, %v1461
  %v1609 = vpack.c.b16 %v1465, %v1462
  %v1610 = vpack.c.b16 %v1469, %v1466
  %v1611 = vpack.c.b16 %v1470, %v1467
  %v1612 = vpack.c.b16 %v1471, %v1468
  %v1613 = vpack.c.b16 %v1475, %v1472
  %v1614 = vpack.c.b16 %v1476, %v1473
  %v1615 = vpack.c.b16 %v1477, %v1474
  %v1616 = vpack.c.b16 %v1481, %v1478
  %v1617 = vpack.c.b16 %v1482, %v1479
  %v1618 = vpack.c.b16 %v1483, %v1480
  %v1619 = vpack.c.b16 %v1487, %v1484
  %v1620 = vpack.c.b16 %v1488, %v1485
  %v1621 = vpack.c.b16 %v1489, %v1486
  %v1622 = vpack.c.b16 %v1493, %v1490
  %v1623 = vpack.c.b16 %v1494, %v1491
  %v1624 = vpack.c.b16 %v1495, %v1492
  %v1625 = vpack.c.b16 %v1499, %v1496
  %v1626 = vpack.c.b16 %v1500, %v1497
  %v1627 = vpack.c.b16 %v1501, %v1498
  %v1628 = vpack.c.b16 %v1505, %v1502
  %v1629 = vpack.c.b16 %v1506, %v1503
  %v1630 = vpack.c.b16 %v1507, %v1504
  %v1631 = vpack.c.b16 %v1511, %v1508
  %v1632 = vpack.c.b16 %v1512, %v1509
  %v1633 = vpack.c.b16 %v1513, %v1510
  %v1634 = vpack.c.b16 %v1517, %v1514
  %v1635 = vpack.c.b16 %v1518, %v1515
  %v1636 = vpack.c.b16 %v1519, %v1516
  %v1637 = vpack.c.b16 %v1523, %v1520
  %v1638 = vpack.c.b16 %v1524, %v1521
  %v1639 = vpack.c.b16 %v1525, %v1522
  %v1640 = vpack.c.b16 %v1529, %v1526
  %v1641 = vpack.c.b16 %v1530, %v1527
  %v1642 = vpack.c.b16 %v1531, %v1528
  %v1643 = vpack.c.b16 %v1535, %v1532
  %v1644 = vpack.c.b16 %v1536, %v1533
  %v1645 = vpack.c.b16 %v1537, %v1534
  %v1646 = vpack.c.b16 %v1541, %v1538
  %v1647 = vpack.c.b16 %v1542, %v1539
  %v1648 = vpack.c.b16 %v1543, %v1540
  %v1649 = vpack.c.b16 %v1547, %v1544
  %v1650 = vpack.c.b16 %v1548, %v1545
  %v1651 = vpack.c.b16 %v1549, %v1546
  %v1652 = vpack.c.b16 %v1553, %v1550
  %v1653 = vpack.c.b16 %v1554, %v1551
  %v1654 = vpack.c.b16 %v1555, %v1552
  %v1655 = vpack.c.b16 %v1559, %v1556
  %v1656 = vpack.c.b16 %v1560, %v1557
  %v1657 = vpack.c.b16 %v1561, %v1558
  %1754 = vmatprep.subr.bf16.mxu0 %v1584
  %1755 = vmatpush1.bf16.msra.mxu0 %v1583
  %1756 = vmatprep.subr.bf16.mxu0 %v1581
  %1757 = vmatpush1.bf16.msra.mxu0 %v1580
  %1758 = vmatprep.subr.bf16.mxu0 %v1578
  %1759 = vmatpush1.bf16.msra.mxu0 %v1577
  %1760 = vmatprep.subr.bf16.mxu0 %v1575
  %1761 = vmatpush1.bf16.msra.mxu0 %v1574
  %1762 = vmatprep.subr.bf16.mxu0 %v1572
  %1763 = vmatpush1.bf16.msra.mxu0 %v1571
  %1764 = vmatprep.subr.bf16.mxu0 %v1569
  %1765 = vmatpush1.bf16.msra.mxu0 %v1568
  %1766 = vmatprep.subr.bf16.mxu0 %v1566
  %1767 = vmatpush1.bf16.msra.mxu0 %v1565
  %1768 = vmatprep.subr.bf16.mxu0 %v1563
  %1769 = vmatpush1.bf16.msra.mxu0 %v1562
  %1770 = vmatprep.subr.bf16.mxu0 %v1608
  %1771 = vmatpush2.bf16.msra.mxu0 %v1607
  %1772 = vmatprep.subr.bf16.mxu0 %v1605
  %1773 = vmatpush2.bf16.msra.mxu0 %v1604
  %1774 = vmatprep.subr.bf16.mxu0 %v1602
  %1775 = vmatpush2.bf16.msra.mxu0 %v1601
  %1776 = vmatprep.subr.bf16.mxu0 %v1599
  %1777 = vmatpush2.bf16.msra.mxu0 %v1598
  %1778 = vmatprep.subr.bf16.mxu0 %v1596
  %1779 = vmatpush2.bf16.msra.mxu0 %v1595
  %1780 = vmatprep.subr.bf16.mxu0 %v1593
  %1781 = vmatpush2.bf16.msra.mxu0 %v1592
  %1782 = vmatprep.subr.bf16.mxu0 %v1590
  %1783 = vmatpush2.bf16.msra.mxu0 %v1589
  %1784 = vmatprep.subr.bf16.mxu0 %v1587
  %1785 = vmatpush2.bf16.msra.mxu0 %v1586
  %1786 = vmatprep.mubr.bf16.mxu0 %v1090
  %1787 = vmatmul.mubr.bf16.gmra.mxu0 %v1089
  %v1788 = vpop.f32.mrf.mxu0
  %v1789 = vadd.f32 %v1230, %v1788
  %v1790 = vpop.f32.mrf.mxu0
  %v1791 = vadd.f32 %v1234, %v1790
  %v1792 = vpop.f32.mrf.mxu0
  %v1793 = vadd.f32 %v1230, %v1792
  %v1794 = vpop.f32.mrf.mxu0
  %v1795 = vadd.f32 %v1234, %v1794
  %1796 = vmatprep.mubr.bf16.mxu0 %v1094
  %1797 = vmatmul.mubr.bf16.gmra.mxu0 %v1093
  %v1798 = vpop.f32.mrf.mxu0
  %v1799 = vadd.f32 %v1230, %v1798
  %v1800 = vpop.f32.mrf.mxu0
  %v1801 = vadd.f32 %v1234, %v1800
  %v1802 = vpop.f32.mrf.mxu0
  %v1803 = vadd.f32 %v1230, %v1802
  %v1804 = vpop.f32.mrf.mxu0
  %v1805 = vadd.f32 %v1234, %v1804
  %1806 = vdwg.mxu0
  %1807 = vmatprep.subr.bf16.mxu0 %v1632
  %1808 = vmatpush1.bf16.msra.mxu0 %v1631
  %1809 = vmatprep.subr.bf16.mxu0 %v1629
  %1810 = vmatpush1.bf16.msra.mxu0 %v1628
  %1811 = vmatprep.subr.bf16.mxu0 %v1626
  %1812 = vmatpush1.bf16.msra.mxu0 %v1625
  %1813 = vmatprep.subr.bf16.mxu0 %v1623
  %1814 = vmatpush1.bf16.msra.mxu0 %v1622
  %1815 = vmatprep.subr.bf16.mxu0 %v1620
  %1816 = vmatpush1.bf16.msra.mxu0 %v1619
  %1817 = vmatprep.subr.bf16.mxu0 %v1617
  %1818 = vmatpush1.bf16.msra.mxu0 %v1616
  %1819 = vmatprep.subr.bf16.mxu0 %v1614
  %1820 = vmatpush1.bf16.msra.mxu0 %v1613
  %1821 = vmatprep.subr.bf16.mxu0 %v1611
  %1822 = vmatpush1.bf16.msra.mxu0 %v1610
  %1823 = vmatprep.subr.bf16.mxu0 %v1656
  %1824 = vmatpush2.bf16.msra.mxu0 %v1655
  %1825 = vmatprep.subr.bf16.mxu0 %v1653
  %1826 = vmatpush2.bf16.msra.mxu0 %v1652
  %1827 = vmatprep.subr.bf16.mxu0 %v1650
  %1828 = vmatpush2.bf16.msra.mxu0 %v1649
  %1829 = vmatprep.subr.bf16.mxu0 %v1647
  %1830 = vmatpush2.bf16.msra.mxu0 %v1646
  %1831 = vmatprep.subr.bf16.mxu0 %v1644
  %1832 = vmatpush2.bf16.msra.mxu0 %v1643
  %1833 = vmatprep.subr.bf16.mxu0 %v1641
  %1834 = vmatpush2.bf16.msra.mxu0 %v1640
  %1835 = vmatprep.subr.bf16.mxu0 %v1638
  %1836 = vmatpush2.bf16.msra.mxu0 %v1637
  %1837 = vmatprep.subr.bf16.mxu0 %v1635
  %1838 = vmatpush2.bf16.msra.mxu0 %v1634
  %1839 = vmatprep.mubr.bf16.mxu0 %v1092
  %1840 = vmatmul.mubr.bf16.gmra.mxu0 %v1091
  %v1841 = vpop.f32.mrf.mxu0
  %v1842 = vadd.f32 %v1789, %v1841
  %v1843 = vpop.f32.mrf.mxu0
  %v1844 = vadd.f32 %v1791, %v1843
  %v1845 = vpop.f32.mrf.mxu0
  %v1846 = vadd.f32 %v1793, %v1845
  %v1847 = vpop.f32.mrf.mxu0
  %v1848 = vadd.f32 %v1795, %v1847
  %1849 = vmatprep.mubr.bf16.mxu0 %v1096
  %1850 = vmatmul.mubr.bf16.gmra.mxu0 %v1095
  %v1851 = vpop.f32.mrf.mxu0
  %v1852 = vadd.f32 %v1799, %v1851
  %v1853 = vpop.f32.mrf.mxu0
  %v1854 = vadd.f32 %v1801, %v1853
  %v1855 = vpop.f32.mrf.mxu0
  %v1856 = vadd.f32 %v1803, %v1855
  %v1857 = vpop.f32.mrf.mxu0
  %v1858 = vadd.f32 %v1805, %v1857
  %1859 = vdwg.mxu0
  %1860 = vmatprep.subr.bf16.mxu0 0
  %1861 = vmatpush1.bf16.msra.mxu0 %v1585
  %1862 = vmatprep.subr.bf16.mxu0 0
  %1863 = vmatpush1.bf16.msra.mxu0 %v1582
  %1864 = vmatprep.subr.bf16.mxu0 0
  %1865 = vmatpush1.bf16.msra.mxu0 %v1579
  %1866 = vmatprep.subr.bf16.mxu0 0
  %1867 = vmatpush1.bf16.msra.mxu0 %v1576
  %1868 = vmatprep.subr.bf16.mxu0 0
  %1869 = vmatpush1.bf16.msra.mxu0 %v1573
  %1870 = vmatprep.subr.bf16.mxu0 0
  %1871 = vmatpush1.bf16.msra.mxu0 %v1570
  %1872 = vmatprep.subr.bf16.mxu0 0
  %1873 = vmatpush1.bf16.msra.mxu0 %v1567
  %1874 = vmatprep.subr.bf16.mxu0 0
  %1875 = vmatpush1.bf16.msra.mxu0 %v1564
  %1876 = vmatprep.subr.bf16.mxu0 0
  %1877 = vmatpush2.bf16.msra.mxu0 %v1609
  %1878 = vmatprep.subr.bf16.mxu0 0
  %1879 = vmatpush2.bf16.msra.mxu0 %v1606
  %1880 = vmatprep.subr.bf16.mxu0 0
  %1881 = vmatpush2.bf16.msra.mxu0 %v1603
  %1882 = vmatprep.subr.bf16.mxu0 0
  %1883 = vmatpush2.bf16.msra.mxu0 %v1600
  %1884 = vmatprep.subr.bf16.mxu0 0
  %1885 = vmatpush2.bf16.msra.mxu0 %v1597
  %1886 = vmatprep.subr.bf16.mxu0 0
  %1887 = vmatpush2.bf16.msra.mxu0 %v1594
  %1888 = vmatprep.subr.bf16.mxu0 0
  %1889 = vmatpush2.bf16.msra.mxu0 %v1591
  %1890 = vmatprep.subr.bf16.mxu0 0
  %1891 = vmatpush2.bf16.msra.mxu0 %v1588
  %1892 = vmatprep.mubr.bf16.mxu0 %v1090
  %1893 = vmatmul.mubr.bf16.gmra.mxu0 %v1089
  %v1894 = vpop.f32.mrf.mxu0
  %v1895 = vadd.f32 %v1238, %v1894
  %v1896 = vpop.f32.mrf.mxu0
  %v1897 = vpop.f32.mrf.mxu0
  %v1898 = vadd.f32 %v1238, %v1897
  %v1899 = vpop.f32.mrf.mxu0
  %1900 = vmatprep.mubr.bf16.mxu0 %v1094
  %1901 = vmatmul.mubr.bf16.gmra.mxu0 %v1093
  %v1902 = vpop.f32.mrf.mxu0
  %v1903 = vadd.f32 %v1238, %v1902
  %v1904 = vpop.f32.mrf.mxu0
  %v1905 = vpop.f32.mrf.mxu0
  %v1906 = vadd.f32 %v1238, %v1905
  %v1907 = vpop.f32.mrf.mxu0
  %1908 = vdwg.mxu0
  %1909 = vmatprep.subr.bf16.mxu0 0
  %1910 = vmatpush1.bf16.msra.mxu0 %v1633
  %1911 = vmatprep.subr.bf16.mxu0 0
  %1912 = vmatpush1.bf16.msra.mxu0 %v1630
  %1913 = vmatprep.subr.bf16.mxu0 0
  %1914 = vmatpush1.bf16.msra.mxu0 %v1627
  %1915 = vmatprep.subr.bf16.mxu0 0
  %1916 = vmatpush1.bf16.msra.mxu0 %v1624
  %1917 = vmatprep.subr.bf16.mxu0 0
  %1918 = vmatpush1.bf16.msra.mxu0 %v1621
  %1919 = vmatprep.subr.bf16.mxu0 0
  %1920 = vmatpush1.bf16.msra.mxu0 %v1618
  %1921 = vmatprep.subr.bf16.mxu0 0
  %1922 = vmatpush1.bf16.msra.mxu0 %v1615
  %1923 = vmatprep.subr.bf16.mxu0 0
  %1924 = vmatpush1.bf16.msra.mxu0 %v1612
  %1925 = vmatprep.subr.bf16.mxu0 0
  %1926 = vmatpush2.bf16.msra.mxu0 %v1657
  %1927 = vmatprep.subr.bf16.mxu0 0
  %1928 = vmatpush2.bf16.msra.mxu0 %v1654
  %1929 = vmatprep.subr.bf16.mxu0 0
  %1930 = vmatpush2.bf16.msra.mxu0 %v1651
  %1931 = vmatprep.subr.bf16.mxu0 0
  %1932 = vmatpush2.bf16.msra.mxu0 %v1648
  %1933 = vmatprep.subr.bf16.mxu0 0
  %1934 = vmatpush2.bf16.msra.mxu0 %v1645
  %1935 = vmatprep.subr.bf16.mxu0 0
  %1936 = vmatpush2.bf16.msra.mxu0 %v1642
  %1937 = vmatprep.subr.bf16.mxu0 0
  %1938 = vmatpush2.bf16.msra.mxu0 %v1639
  %1939 = vmatprep.subr.bf16.mxu0 0
  %1940 = vmatpush2.bf16.msra.mxu0 %v1636
  %1941 = vmatprep.mubr.bf16.mxu0 %v1092
  %1942 = vmatmul.mubr.bf16.gmra.mxu0 %v1091
  %v1943 = vpop.f32.mrf.mxu0
  %v1944 = vadd.f32 %v1895, %v1943
  %v1945 = vpop.f32.mrf.mxu0
  %v1946 = vpop.f32.mrf.mxu0
  %v1947 = vadd.f32 %v1898, %v1946
  %v1948 = vpop.f32.mrf.mxu0
  %1949 = vmatprep.mubr.bf16.mxu0 %v1096
  %1950 = vmatmul.mubr.bf16.gmra.mxu0 %v1095
  %v1951 = vpop.f32.mrf.mxu0
  %v1952 = vadd.f32 %v1903, %v1951
  %v1953 = vpop.f32.mrf.mxu0
  %v1954 = vpop.f32.mrf.mxu0
  %v1955 = vadd.f32 %v1906, %v1954
  %v1956 = vpop.f32.mrf.mxu0
  %1957 = vdwg.mxu0
  %v1958 = vmax.f32 %v1842, 0.0
  %v1959 = vmax.f32 %v1844, 0.0
  %v1960 = vmax.f32 %v1944, 0.0
  %v1961 = vmax.f32 %v1846, 0.0
  %v1962 = vmax.f32 %v1848, 0.0
  %v1963 = vmax.f32 %v1947, 0.0
  %v1964 = vmax.f32 %v1852, 0.0
  %v1965 = vmax.f32 %v1854, 0.0
  %v1966 = vmax.f32 %v1952, 0.0
  %v1967 = vmax.f32 %v1856, 0.0
  %v1968 = vmax.f32 %v1858, 0.0
  %v1969 = vmax.f32 %v1955, 0.0
  %v1970 = vpack.c.bf16 %v1961, %v1958
  %v1971 = vpack.c.bf16 %v1962, %v1959
  %v1972 = vpack.c.bf16 %v1963, %v1960
  %v1973 = vpack.c.bf16 %v1967, %v1964
  %v1974 = vpack.c.bf16 %v1968, %v1965
  %v1975 = vpack.c.bf16 %v1969, %v1966
  %v1976 = vld [vmem:[%s5] sm:$0xff]
  %v1977 = vld [vmem:[%s5 + $0x8] sm:$0xff]
  %v1978 = vld [vmem:[%s5 + $0x10] sm:$0xff]
  %v1979 = vld [vmem:[%s5 + $0x18] sm:$0xff]
  %v1980 = vld [vmem:[%s5 + $0x20] sm:$0xff]
  %v1981 = vld [vmem:[%s5 + $0x28] sm:$0xff]
  %v1982 = vld [vmem:[%s5 + $0x30] sm:$0xff]
  %v1983 = vld [vmem:[%s5 + $0x38] sm:$0xff]
  %v1984 = vld [vmem:[%s5 + $0x40] sm:$0xff]
  %v1985 = vld [vmem:[%s5 + $0x48] sm:$0xff]
  %v1986 = vld [vmem:[%s5 + $0x50] sm:$0xff]
  %v1987 = vld [vmem:[%s5 + $0x58] sm:$0xff]
  %v1988 = vld [vmem:[%s5 + $0x60] sm:$0xff]
  %v1989 = vld [vmem:[%s5 + $0x68] sm:$0xff]
  %v1990 = vld [vmem:[%s5 + $0x70] sm:$0xff]
  %v1991 = vld [vmem:[%s5 + $0x78] sm:$0xff]
  %v1992 = vld [vmem:[%s5 + $0x80] sm:$0xff]
  %v1993 = vld [vmem:[%s5 + $0x88] sm:$0xff]
  %v1994 = vld [vmem:[%s5 + $0x90] sm:$0xff]
  %v1995 = vld [vmem:[%s5 + $0x98] sm:$0xff]
  %v1996 = vld [vmem:[%s5 + $0xa0] sm:$0xff]
  %v1997 = vld [vmem:[%s5 + $0xa8] sm:$0xff]
  %v1998 = vld [vmem:[%s5 + $0xb0] sm:$0xff]
  %v1999 = vld [vmem:[%s5 + $0xb8] sm:$0xff]
  %v2000 = vld [vmem:[%s5 + $0xc0] sm:$0xff]
  %v2001 = vld [vmem:[%s5 + $0xc8] sm:$0xff]
  %v2002 = vld [vmem:[%s5 + $0xd0] sm:$0xff]
  %v2003 = vld [vmem:[%s5 + $0xd8] sm:$0xff]
  %v2004 = vld [vmem:[%s5 + $0xe0] sm:$0xff]
  %v2005 = vld [vmem:[%s5 + $0xe8] sm:$0xff]
  %v2006 = vld [vmem:[%s5 + $0xf0] sm:$0xff]
  %v2007 = vld [vmem:[%s5 + $0xf8] sm:$0xff]
  %v2008 = vld [vmem:[%s5 + $0x100] sm:$0xff]
  %v2009 = vld [vmem:[%s5 + $0x108] sm:$0xff]
  %v2010 = vld [vmem:[%s5 + $0x110] sm:$0xff]
  %v2011 = vld [vmem:[%s5 + $0x118] sm:$0xff]
  %v2012 = vld [vmem:[%s5 + $0x120] sm:$0xff]
  %v2013 = vld [vmem:[%s5 + $0x128] sm:$0xff]
  %v2014 = vld [vmem:[%s5 + $0x130] sm:$0xff]
  %v2015 = vld [vmem:[%s5 + $0x138] sm:$0xff]
  %v2016 = vld [vmem:[%s5 + $0x140] sm:$0xff]
  %v2017 = vld [vmem:[%s5 + $0x148] sm:$0xff]
  %v2018 = vld [vmem:[%s5 + $0x150] sm:$0xff]
  %v2019 = vld [vmem:[%s5 + $0x158] sm:$0xff]
  %v2020 = vld [vmem:[%s5 + $0x160] sm:$0xff]
  %v2021 = vld [vmem:[%s5 + $0x168] sm:$0xff]
  %v2022 = vld [vmem:[%s5 + $0x170] sm:$0xff]
  %v2023 = vld [vmem:[%s5 + $0x178] sm:$0xff]
  %v2024 = vld [vmem:[%s6] sm:$0x3]
  %v2026 = vlaneseq
  %v2027 = vshrl.u32 %v2026, 7
  %v2028 = vsub.s32 0, %v2027
  %v2029 = vrot.slane %v2024, %v2028
  %v2030 = vlaneseq
  %v2031 = vshrl.u32 %v2030, 7
  %v2032 = vsub.s32 1, %v2031
  %v2033 = vrot.slane %v2024, %v2032
  %v2084 = vunpack.c.l.b16 %v1976
  %v2085 = vunpack.c.h.b16 %v1976
  %v2086 = vunpack.c.l.b16 %v1977
  %v2087 = vunpack.c.h.b16 %v1977
  %v2088 = vunpack.c.l.b16 %v1978
  %v2089 = vunpack.c.h.b16 %v1978
  %v2090 = vunpack.c.l.b16 %v1979
  %v2091 = vunpack.c.h.b16 %v1979
  %v2092 = vunpack.c.l.b16 %v1980
  %v2093 = vunpack.c.h.b16 %v1980
  %v2094 = vunpack.c.l.b16 %v1981
  %v2095 = vunpack.c.h.b16 %v1981
  %v2096 = vunpack.c.l.b16 %v1982
  %v2097 = vunpack.c.h.b16 %v1982
  %v2098 = vunpack.c.l.b16 %v1983
  %v2099 = vunpack.c.h.b16 %v1983
  %v2100 = vunpack.c.l.b16 %v1984
  %v2101 = vunpack.c.h.b16 %v1984
  %v2102 = vunpack.c.l.b16 %v1985
  %v2103 = vunpack.c.h.b16 %v1985
  %v2104 = vunpack.c.l.b16 %v1986
  %v2105 = vunpack.c.h.b16 %v1986
  %v2106 = vunpack.c.l.b16 %v1987
  %v2107 = vunpack.c.h.b16 %v1987
  %v2108 = vunpack.c.l.b16 %v1988
  %v2109 = vunpack.c.h.b16 %v1988
  %v2110 = vunpack.c.l.b16 %v1989
  %v2111 = vunpack.c.h.b16 %v1989
  %v2112 = vunpack.c.l.b16 %v1990
  %v2113 = vunpack.c.h.b16 %v1990
  %v2114 = vunpack.c.l.b16 %v1991
  %v2115 = vunpack.c.h.b16 %v1991
  %v2116 = vunpack.c.l.b16 %v1992
  %v2117 = vunpack.c.h.b16 %v1992
  %v2118 = vunpack.c.l.b16 %v1993
  %v2119 = vunpack.c.h.b16 %v1993
  %v2120 = vunpack.c.l.b16 %v1994
  %v2121 = vunpack.c.h.b16 %v1994
  %v2122 = vunpack.c.l.b16 %v1995
  %v2123 = vunpack.c.h.b16 %v1995
  %v2124 = vunpack.c.l.b16 %v1996
  %v2125 = vunpack.c.h.b16 %v1996
  %v2126 = vunpack.c.l.b16 %v1997
  %v2127 = vunpack.c.h.b16 %v1997
  %v2128 = vunpack.c.l.b16 %v1998
  %v2129 = vunpack.c.h.b16 %v1998
  %v2130 = vunpack.c.l.b16 %v1999
  %v2131 = vunpack.c.h.b16 %v1999
  %v2132 = vunpack.c.l.b16 %v2000
  %v2133 = vunpack.c.h.b16 %v2000
  %v2134 = vunpack.c.l.b16 %v2001
  %v2135 = vunpack.c.h.b16 %v2001
  %v2136 = vunpack.c.l.b16 %v2002
  %v2137 = vunpack.c.h.b16 %v2002
  %v2138 = vunpack.c.l.b16 %v2003
  %v2139 = vunpack.c.h.b16 %v2003
  %v2140 = vunpack.c.l.b16 %v2004
  %v2141 = vunpack.c.h.b16 %v2004
  %v2142 = vunpack.c.l.b16 %v2005
  %v2143 = vunpack.c.h.b16 %v2005
  %v2144 = vunpack.c.l.b16 %v2006
  %v2145 = vunpack.c.h.b16 %v2006
  %v2146 = vunpack.c.l.b16 %v2007
  %v2147 = vunpack.c.h.b16 %v2007
  %v2148 = vunpack.c.l.b16 %v2008
  %v2149 = vunpack.c.h.b16 %v2008
  %v2150 = vunpack.c.l.b16 %v2009
  %v2151 = vunpack.c.h.b16 %v2009
  %v2152 = vunpack.c.l.b16 %v2010
  %v2153 = vunpack.c.h.b16 %v2010
  %v2154 = vunpack.c.l.b16 %v2011
  %v2155 = vunpack.c.h.b16 %v2011
  %v2156 = vunpack.c.l.b16 %v2012
  %v2157 = vunpack.c.h.b16 %v2012
  %v2158 = vunpack.c.l.b16 %v2013
  %v2159 = vunpack.c.h.b16 %v2013
  %v2160 = vunpack.c.l.b16 %v2014
  %v2161 = vunpack.c.h.b16 %v2014
  %v2162 = vunpack.c.l.b16 %v2015
  %v2163 = vunpack.c.h.b16 %v2015
  %v2164 = vunpack.c.l.b16 %v2016
  %v2165 = vunpack.c.h.b16 %v2016
  %v2166 = vunpack.c.l.b16 %v2017
  %v2167 = vunpack.c.h.b16 %v2017
  %v2168 = vunpack.c.l.b16 %v2018
  %v2169 = vunpack.c.h.b16 %v2018
  %v2170 = vunpack.c.l.b16 %v2019
  %v2171 = vunpack.c.h.b16 %v2019
  %v2172 = vunpack.c.l.b16 %v2020
  %v2173 = vunpack.c.h.b16 %v2020
  %v2174 = vunpack.c.l.b16 %v2021
  %v2175 = vunpack.c.h.b16 %v2021
  %v2176 = vunpack.c.l.b16 %v2022
  %v2177 = vunpack.c.h.b16 %v2022
  %v2178 = vunpack.c.l.b16 %v2023
  %v2179 = vunpack.c.h.b16 %v2023
  %v2180 = vpack.c.b16 %v2086, %v2084
  %v2181 = vpack.c.b16 %v2087, %v2085
  %v2182 = vpack.c.b16 %v2090, %v2088
  %v2183 = vpack.c.b16 %v2091, %v2089
  %v2184 = vpack.c.b16 %v2094, %v2092
  %v2185 = vpack.c.b16 %v2095, %v2093
  %v2186 = vpack.c.b16 %v2098, %v2096
  %v2187 = vpack.c.b16 %v2099, %v2097
  %v2188 = vpack.c.b16 %v2102, %v2100
  %v2189 = vpack.c.b16 %v2103, %v2101
  %v2190 = vpack.c.b16 %v2106, %v2104
  %v2191 = vpack.c.b16 %v2107, %v2105
  %v2192 = vpack.c.b16 %v2110, %v2108
  %v2193 = vpack.c.b16 %v2111, %v2109
  %v2194 = vpack.c.b16 %v2114, %v2112
  %v2195 = vpack.c.b16 %v2115, %v2113
  %v2196 = vpack.c.b16 %v2118, %v2116
  %v2197 = vpack.c.b16 %v2119, %v2117
  %v2198 = vpack.c.b16 %v2122, %v2120
  %v2199 = vpack.c.b16 %v2123, %v2121
  %v2200 = vpack.c.b16 %v2126, %v2124
  %v2201 = vpack.c.b16 %v2127, %v2125
  %v2202 = vpack.c.b16 %v2130, %v2128
  %v2203 = vpack.c.b16 %v2131, %v2129
  %v2204 = vpack.c.b16 %v2134, %v2132
  %v2205 = vpack.c.b16 %v2135, %v2133
  %v2206 = vpack.c.b16 %v2138, %v2136
  %v2207 = vpack.c.b16 %v2139, %v2137
  %v2208 = vpack.c.b16 %v2142, %v2140
  %v2209 = vpack.c.b16 %v2143, %v2141
  %v2210 = vpack.c.b16 %v2146, %v2144
  %v2211 = vpack.c.b16 %v2147, %v2145
  %v2212 = vpack.c.b16 %v2150, %v2148
  %v2213 = vpack.c.b16 %v2151, %v2149
  %v2214 = vpack.c.b16 %v2154, %v2152
  %v2215 = vpack.c.b16 %v2155, %v2153
  %v2216 = vpack.c.b16 %v2158, %v2156
  %v2217 = vpack.c.b16 %v2159, %v2157
  %v2218 = vpack.c.b16 %v2162, %v2160
  %v2219 = vpack.c.b16 %v2163, %v2161
  %v2220 = vpack.c.b16 %v2166, %v2164
  %v2221 = vpack.c.b16 %v2167, %v2165
  %v2222 = vpack.c.b16 %v2170, %v2168
  %v2223 = vpack.c.b16 %v2171, %v2169
  %v2224 = vpack.c.b16 %v2174, %v2172
  %v2225 = vpack.c.b16 %v2175, %v2173
  %v2226 = vpack.c.b16 %v2178, %v2176
  %v2227 = vpack.c.b16 %v2179, %v2177
  %2276 = vmatprep.subr.bf16.mxu0 %v2195
  %2277 = vmatpush1.bf16.msra.mxu0 %v2194
  %2278 = vmatprep.subr.bf16.mxu0 %v2193
  %2279 = vmatpush1.bf16.msra.mxu0 %v2192
  %2280 = vmatprep.subr.bf16.mxu0 %v2191
  %2281 = vmatpush1.bf16.msra.mxu0 %v2190
  %2282 = vmatprep.subr.bf16.mxu0 %v2189
  %2283 = vmatpush1.bf16.msra.mxu0 %v2188
  %2284 = vmatprep.subr.bf16.mxu0 %v2187
  %2285 = vmatpush1.bf16.msra.mxu0 %v2186
  %2286 = vmatprep.subr.bf16.mxu0 %v2185
  %2287 = vmatpush1.bf16.msra.mxu0 %v2184
  %2288 = vmatprep.subr.bf16.mxu0 %v2183
  %2289 = vmatpush1.bf16.msra.mxu0 %v2182
  %2290 = vmatprep.subr.bf16.mxu0 %v2181
  %2291 = vmatpush1.bf16.msra.mxu0 %v2180
  %2292 = vmatprep.subr.bf16.mxu0 %v2211
  %2293 = vmatpush2.bf16.msra.mxu0 %v2210
  %2294 = vmatprep.subr.bf16.mxu0 %v2209
  %2295 = vmatpush2.bf16.msra.mxu0 %v2208
  %2296 = vmatprep.subr.bf16.mxu0 %v2207
  %2297 = vmatpush2.bf16.msra.mxu0 %v2206
  %2298 = vmatprep.subr.bf16.mxu0 %v2205
  %2299 = vmatpush2.bf16.msra.mxu0 %v2204
  %2300 = vmatprep.subr.bf16.mxu0 %v2203
  %2301 = vmatpush2.bf16.msra.mxu0 %v2202
  %2302 = vmatprep.subr.bf16.mxu0 %v2201
  %2303 = vmatpush2.bf16.msra.mxu0 %v2200
  %2304 = vmatprep.subr.bf16.mxu0 %v2199
  %2305 = vmatpush2.bf16.msra.mxu0 %v2198
  %2306 = vmatprep.subr.bf16.mxu0 %v2197
  %2307 = vmatpush2.bf16.msra.mxu0 %v2196
  %2308 = vmatprep.mubr.bf16.mxu0 %v1971
  %2309 = vmatmul.mubr.bf16.gmra.mxu0 %v1970
  %v2310 = vpop.f32.mrf.mxu0
  %v2311 = vadd.f32 %v2029, %v2310
  %v2312 = vpop.f32.mrf.mxu0
  %v2313 = vadd.f32 %v2033, %v2312
  %v2314 = vpop.f32.mrf.mxu0
  %v2315 = vadd.f32 %v2029, %v2314
  %v2316 = vpop.f32.mrf.mxu0
  %v2317 = vadd.f32 %v2033, %v2316
  %2318 = vmatprep.mubr.bf16.mxu0 %v1974
  %2319 = vmatmul.mubr.bf16.gmra.mxu0 %v1973
  %v2320 = vpop.f32.mrf.mxu0
  %v2321 = vadd.f32 %v2029, %v2320
  %v2322 = vpop.f32.mrf.mxu0
  %v2323 = vadd.f32 %v2033, %v2322
  %v2324 = vpop.f32.mrf.mxu0
  %v2325 = vadd.f32 %v2029, %v2324
  %v2326 = vpop.f32.mrf.mxu0
  %v2327 = vadd.f32 %v2033, %v2326
  %2328 = vdwg.mxu0
  %2329 = vmatprep.subr.bf16.mxu0 %v2227
  %2330 = vmatpush1.bf16.msra.mxu0 %v2226
  %2331 = vmatprep.subr.bf16.mxu0 %v2225
  %2332 = vmatpush1.bf16.msra.mxu0 %v2224
  %2333 = vmatprep.subr.bf16.mxu0 %v2223
  %2334 = vmatpush1.bf16.msra.mxu0 %v2222
  %2335 = vmatprep.subr.bf16.mxu0 %v2221
  %2336 = vmatpush1.bf16.msra.mxu0 %v2220
  %2337 = vmatprep.subr.bf16.mxu0 %v2219
  %2338 = vmatpush1.bf16.msra.mxu0 %v2218
  %2339 = vmatprep.subr.bf16.mxu0 %v2217
  %2340 = vmatpush1.bf16.msra.mxu0 %v2216
  %2341 = vmatprep.subr.bf16.mxu0 %v2215
  %2342 = vmatpush1.bf16.msra.mxu0 %v2214
  %2343 = vmatprep.subr.bf16.mxu0 %v2213
  %2344 = vmatpush1.bf16.msra.mxu0 %v2212
  %2345 = vmatprep.subr.bf16.mxu0 0
  %2346 = vmatpush2.bf16.msra.mxu0 0
  %2347 = vmatprep.subr.bf16.mxu0 0
  %2348 = vmatpush2.bf16.msra.mxu0 0
  %2349 = vmatprep.subr.bf16.mxu0 0
  %2350 = vmatpush2.bf16.msra.mxu0 0
  %2351 = vmatprep.subr.bf16.mxu0 0
  %2352 = vmatpush2.bf16.msra.mxu0 0
  %2353 = vmatprep.subr.bf16.mxu0 0
  %2354 = vmatpush2.bf16.msra.mxu0 0
  %2355 = vmatprep.subr.bf16.mxu0 0
  %2356 = vmatpush2.bf16.msra.mxu0 0
  %2357 = vmatprep.subr.bf16.mxu0 0
  %2358 = vmatpush2.bf16.msra.mxu0 0
  %2359 = vmatprep.subr.bf16.mxu0 0
  %2360 = vmatpush2.bf16.msra.mxu0 0
  %2361 = vmatprep.mubr.bf16.mxu0 0
  %2362 = vmatmul.mubr.bf16.gmra.mxu0 %v1972
  %v2363 = vpop.f32.mrf.mxu0
  %v2364 = vadd.f32 %v2311, %v2363
  %v2365 = vpop.f32.mrf.mxu0
  %v2366 = vadd.f32 %v2313, %v2365
  %v2367 = vpop.f32.mrf.mxu0
  %v2368 = vadd.f32 %v2315, %v2367
  %v2369 = vpop.f32.mrf.mxu0
  %v2370 = vadd.f32 %v2317, %v2369
  %2371 = vmatprep.mubr.bf16.mxu0 0
  %2372 = vmatmul.mubr.bf16.gmra.mxu0 %v1975
  %v2373 = vpop.f32.mrf.mxu0
  %v2374 = vadd.f32 %v2321, %v2373
  %v2375 = vpop.f32.mrf.mxu0
  %v2376 = vadd.f32 %v2323, %v2375
  %v2377 = vpop.f32.mrf.mxu0
  %v2378 = vadd.f32 %v2325, %v2377
  %v2379 = vpop.f32.mrf.mxu0
  %v2380 = vadd.f32 %v2327, %v2379
  %2381 = vdwg.mxu0
  %2382 = vst [vmem:[%s13] sm:$0xff] %v2364
  %2383 = vst [vmem:[%s13 + $0x8] sm:$0xff] %v2366
  %2384 = vst [vmem:[%s13 + $0x10] sm:$0xff] %v2368
  %2385 = vst [vmem:[%s13 + $0x18] sm:$0xff] %v2370
  %2386 = vst [vmem:[%s13 + $0x20] sm:$0xff] %v2374
  %2387 = vst [vmem:[%s13 + $0x28] sm:$0xff] %v2376
  %2388 = vst [vmem:[%s13 + $0x30] sm:$0xff] %v2378
  %2389 = vst [vmem:[%s13 + $0x38] sm:$0xff] %v2380
  %v2390 = vpack.c.bf16 %v2368, %v2364
  %v2391 = vpack.c.bf16 %v2370, %v2366
  %v2392 = vpack.c.bf16 %v2378, %v2374
  %v2393 = vpack.c.bf16 %v2380, %v2376
  %v2394 = vld [vmem:[%s7] sm:$0xf]
  %v2395 = vld [vmem:[%s7 + $0x4] sm:$0xf]
  %v2396 = vld [vmem:[%s7 + $0x8] sm:$0xf]
  %v2397 = vld [vmem:[%s7 + $0xc] sm:$0xf]
  %v2398 = vld [vmem:[%s7 + $0x10] sm:$0xf]
  %v2399 = vld [vmem:[%s7 + $0x14] sm:$0xf]
  %v2400 = vld [vmem:[%s7 + $0x18] sm:$0xf]
  %v2401 = vld [vmem:[%s7 + $0x1c] sm:$0xf]
  %v2402 = vld [vmem:[%s7 + $0x20] sm:$0xf]
  %v2403 = vld [vmem:[%s7 + $0x24] sm:$0xf]
  %v2404 = vld [vmem:[%s7 + $0x28] sm:$0xf]
  %v2405 = vld [vmem:[%s7 + $0x2c] sm:$0xf]
  %v2406 = vld [vmem:[%s7 + $0x30] sm:$0xf]
  %v2407 = vld [vmem:[%s7 + $0x34] sm:$0xf]
  %v2408 = vld [vmem:[%s7 + $0x38] sm:$0xf]
  %v2409 = vld [vmem:[%s7 + $0x3c] sm:$0xf]
  %v2410 = vld [vmem:[%s7 + $0x40] sm:$0xf]
  %v2411 = vld [vmem:[%s7 + $0x44] sm:$0xf]
  %v2412 = vld [vmem:[%s7 + $0x48] sm:$0xf]
  %v2413 = vld [vmem:[%s7 + $0x4c] sm:$0xf]
  %v2414 = vld [vmem:[%s7 + $0x50] sm:$0xf]
  %v2415 = vld [vmem:[%s7 + $0x54] sm:$0xf]
  %v2416 = vld [vmem:[%s7 + $0x58] sm:$0xf]
  %v2417 = vld [vmem:[%s7 + $0x5c] sm:$0xf]
  %v2418 = vld [vmem:[%s7 + $0x60] sm:$0xf]
  %v2419 = vld [vmem:[%s7 + $0x64] sm:$0xf]
  %v2420 = vld [vmem:[%s7 + $0x68] sm:$0xf]
  %v2421 = vld [vmem:[%s7 + $0x6c] sm:$0xf]
  %v2422 = vld [vmem:[%s7 + $0x70] sm:$0xf]
  %v2423 = vld [vmem:[%s7 + $0x74] sm:$0xf]
  %v2424 = vld [vmem:[%s7 + $0x78] sm:$0xf]
  %v2425 = vld [vmem:[%s7 + $0x7c] sm:$0xf]
  %v2426 = vld [vmem:[%s8] sm:$0x1]
  %v2428 = vlaneseq
  %v2429 = vshrl.u32 %v2428, 7
  %v2430 = vsub.s32 0, %v2429
  %v2431 = vrot.slane %v2426, %v2430
  %v2465 = vunpack.c.l.b16 %v2394
  %v2466 = vunpack.c.l.b16 %v2395
  %v2467 = vunpack.c.l.b16 %v2396
  %v2468 = vunpack.c.l.b16 %v2397
  %v2469 = vunpack.c.l.b16 %v2398
  %v2470 = vunpack.c.l.b16 %v2399
  %v2471 = vunpack.c.l.b16 %v2400
  %v2472 = vunpack.c.l.b16 %v2401
  %v2473 = vunpack.c.l.b16 %v2402
  %v2474 = vunpack.c.l.b16 %v2403
  %v2475 = vunpack.c.l.b16 %v2404
  %v2476 = vunpack.c.l.b16 %v2405
  %v2477 = vunpack.c.l.b16 %v2406
  %v2478 = vunpack.c.l.b16 %v2407
  %v2479 = vunpack.c.l.b16 %v2408
  %v2480 = vunpack.c.l.b16 %v2409
  %v2481 = vunpack.c.l.b16 %v2410
  %v2482 = vunpack.c.l.b16 %v2411
  %v2483 = vunpack.c.l.b16 %v2412
  %v2484 = vunpack.c.l.b16 %v2413
  %v2485 = vunpack.c.l.b16 %v2414
  %v2486 = vunpack.c.l.b16 %v2415
  %v2487 = vunpack.c.l.b16 %v2416
  %v2488 = vunpack.c.l.b16 %v2417
  %v2489 = vunpack.c.l.b16 %v2418
  %v2490 = vunpack.c.l.b16 %v2419
  %v2491 = vunpack.c.l.b16 %v2420
  %v2492 = vunpack.c.l.b16 %v2421
  %v2493 = vunpack.c.l.b16 %v2422
  %v2494 = vunpack.c.l.b16 %v2423
  %v2495 = vunpack.c.l.b16 %v2424
  %v2496 = vunpack.c.l.b16 %v2425
  %v2497 = vpack.c.b16 %v2466, %v2465
  %v2498 = vpack.c.b16 %v2468, %v2467
  %v2499 = vpack.c.b16 %v2470, %v2469
  %v2500 = vpack.c.b16 %v2472, %v2471
  %v2501 = vpack.c.b16 %v2474, %v2473
  %v2502 = vpack.c.b16 %v2476, %v2475
  %v2503 = vpack.c.b16 %v2478, %v2477
  %v2504 = vpack.c.b16 %v2480, %v2479
  %v2505 = vpack.c.b16 %v2482, %v2481
  %v2506 = vpack.c.b16 %v2484, %v2483
  %v2507 = vpack.c.b16 %v2486, %v2485
  %v2508 = vpack.c.b16 %v2488, %v2487
  %v2509 = vpack.c.b16 %v2490, %v2489
  %v2510 = vpack.c.b16 %v2492, %v2491
  %v2511 = vpack.c.b16 %v2494, %v2493
  %v2512 = vpack.c.b16 %v2496, %v2495
  %2529 = vmatprep.subr.bf16.mxu0 0
  %2530 = vmatpush1.bf16.msra.mxu0 %v2504
  %2531 = vmatprep.subr.bf16.mxu0 0
  %2532 = vmatpush1.bf16.msra.mxu0 %v2503
  %2533 = vmatprep.subr.bf16.mxu0 0
  %2534 = vmatpush1.bf16.msra.mxu0 %v2502
  %2535 = vmatprep.subr.bf16.mxu0 0
  %2536 = vmatpush1.bf16.msra.mxu0 %v2501
  %2537 = vmatprep.subr.bf16.mxu0 0
  %2538 = vmatpush1.bf16.msra.mxu0 %v2500
  %2539 = vmatprep.subr.bf16.mxu0 0
  %2540 = vmatpush1.bf16.msra.mxu0 %v2499
  %2541 = vmatprep.subr.bf16.mxu0 0
  %2542 = vmatpush1.bf16.msra.mxu0 %v2498
  %2543 = vmatprep.subr.bf16.mxu0 0
  %2544 = vmatpush1.bf16.msra.mxu0 %v2497
  %2545 = vmatprep.subr.bf16.mxu0 0
  %2546 = vmatpush2.bf16.msra.mxu0 %v2512
  %2547 = vmatprep.subr.bf16.mxu0 0
  %2548 = vmatpush2.bf16.msra.mxu0 %v2511
  %2549 = vmatprep.subr.bf16.mxu0 0
  %2550 = vmatpush2.bf16.msra.mxu0 %v2510
  %2551 = vmatprep.subr.bf16.mxu0 0
  %2552 = vmatpush2.bf16.msra.mxu0 %v2509
  %2553 = vmatprep.subr.bf16.mxu0 0
  %2554 = vmatpush2.bf16.msra.mxu0 %v2508
  %2555 = vmatprep.subr.bf16.mxu0 0
  %2556 = vmatpush2.bf16.msra.mxu0 %v2507
  %2557 = vmatprep.subr.bf16.mxu0 0
  %2558 = vmatpush2.bf16.msra.mxu0 %v2506
  %2559 = vmatprep.subr.bf16.mxu0 0
  %2560 = vmatpush2.bf16.msra.mxu0 %v2505
  %2561 = vmatprep.mubr.bf16.mxu0 %v2391
  %2562 = vmatmul.mubr.bf16.gmra.mxu0 %v2390
  %v2563 = vpop.f32.mrf.mxu0
  %v2564 = vadd.f32 %v2431, %v2563
  %v2565 = vpop.f32.mrf.mxu0
  %v2566 = vpop.f32.mrf.mxu0
  %v2567 = vadd.f32 %v2431, %v2566
  %v2568 = vpop.f32.mrf.mxu0
  %2569 = vmatprep.mubr.bf16.mxu0 %v2393
  %2570 = vmatmul.mubr.bf16.gmra.mxu0 %v2392
  %v2571 = vpop.f32.mrf.mxu0
  %v2572 = vadd.f32 %v2431, %v2571
  %v2573 = vpop.f32.mrf.mxu0
  %v2574 = vpop.f32.mrf.mxu0
  %v2575 = vadd.f32 %v2431, %v2574
  %v2576 = vpop.f32.mrf.mxu0
  %2577 = vdwg.mxu0
  %v2578 = vmax.f32 %v2564, 0.0
  %v2579 = vmax.f32 %v2567, 0.0
  %v2580 = vmax.f32 %v2572, 0.0
  %v2581 = vmax.f32 %v2575, 0.0
  %v2582 = vpack.c.bf16 %v2579, %v2578
  %v2583 = vpack.c.bf16 %v2581, %v2580
  %v2584 = vld [vmem:[%s9] sm:$0xf]
  %v2585 = vld [vmem:[%s9 + $0x4] sm:$0xf]
  %v2586 = vld [vmem:[%s9 + $0x8] sm:$0xf]
  %v2587 = vld [vmem:[%s9 + $0xc] sm:$0xf]
  %v2588 = vld [vmem:[%s9 + $0x10] sm:$0xf]
  %v2589 = vld [vmem:[%s9 + $0x14] sm:$0xf]
  %v2590 = vld [vmem:[%s9 + $0x18] sm:$0xf]
  %v2591 = vld [vmem:[%s9 + $0x1c] sm:$0xf]
  %v2592 = vld [vmem:[%s9 + $0x20] sm:$0xf]
  %v2593 = vld [vmem:[%s9 + $0x24] sm:$0xf]
  %v2594 = vld [vmem:[%s9 + $0x28] sm:$0xf]
  %v2595 = vld [vmem:[%s9 + $0x2c] sm:$0xf]
  %v2596 = vld [vmem:[%s9 + $0x30] sm:$0xf]
  %v2597 = vld [vmem:[%s9 + $0x34] sm:$0xf]
  %v2598 = vld [vmem:[%s9 + $0x38] sm:$0xf]
  %v2599 = vld [vmem:[%s9 + $0x3c] sm:$0xf]
  %v2600 = vld [vmem:[%s10] sm:$0x1]
  %v2602 = vlaneseq
  %v2603 = vshrl.u32 %v2602, 7
  %v2604 = vsub.s32 0, %v2603
  %v2605 = vrot.slane %v2600, %v2604
  %v2623 = vunpack.c.l.b16 %v2584
  %v2624 = vunpack.c.l.b16 %v2585
  %v2625 = vunpack.c.l.b16 %v2586
  %v2626 = vunpack.c.l.b16 %v2587
  %v2627 = vunpack.c.l.b16 %v2588
  %v2628 = vunpack.c.l.b16 %v2589
  %v2629 = vunpack.c.l.b16 %v2590
  %v2630 = vunpack.c.l.b16 %v2591
  %v2631 = vunpack.c.l.b16 %v2592
  %v2632 = vunpack.c.l.b16 %v2593
  %v2633 = vunpack.c.l.b16 %v2594
  %v2634 = vunpack.c.l.b16 %v2595
  %v2635 = vunpack.c.l.b16 %v2596
  %v2636 = vunpack.c.l.b16 %v2597
  %v2637 = vunpack.c.l.b16 %v2598
  %v2638 = vunpack.c.l.b16 %v2599
  %v2639 = vpack.c.b16 %v2624, %v2623
  %v2640 = vpack.c.b16 %v2626, %v2625
  %v2641 = vpack.c.b16 %v2628, %v2627
  %v2642 = vpack.c.b16 %v2630, %v2629
  %v2643 = vpack.c.b16 %v2632, %v2631
  %v2644 = vpack.c.b16 %v2634, %v2633
  %v2645 = vpack.c.b16 %v2636, %v2635
  %v2646 = vpack.c.b16 %v2638, %v2637
  %2655 = vmatprep.subr.bf16.mxu0 0
  %2656 = vmatpush1.bf16.msra.mxu0 %v2646
  %2657 = vmatprep.subr.bf16.mxu0 0
  %2658 = vmatpush1.bf16.msra.mxu0 %v2645
  %2659 = vmatprep.subr.bf16.mxu0 0
  %2660 = vmatpush1.bf16.msra.mxu0 %v2644
  %2661 = vmatprep.subr.bf16.mxu0 0
  %2662 = vmatpush1.bf16.msra.mxu0 %v2643
  %2663 = vmatprep.subr.bf16.mxu0 0
  %2664 = vmatpush1.bf16.msra.mxu0 %v2642
  %2665 = vmatprep.subr.bf16.mxu0 0
  %2666 = vmatpush1.bf16.msra.mxu0 %v2641
  %2667 = vmatprep.subr.bf16.mxu0 0
  %2668 = vmatpush1.bf16.msra.mxu0 %v2640
  %2669 = vmatprep.subr.bf16.mxu0 0
  %2670 = vmatpush1.bf16.msra.mxu0 %v2639
  %2671 = vmatprep.subr.bf16.mxu0 0
  %2672 = vmatpush2.bf16.msra.mxu0 0
  %2673 = vmatprep.subr.bf16.mxu0 0
  %2674 = vmatpush2.bf16.msra.mxu0 0
  %2675 = vmatprep.subr.bf16.mxu0 0
  %2676 = vmatpush2.bf16.msra.mxu0 0
  %2677 = vmatprep.subr.bf16.mxu0 0
  %2678 = vmatpush2.bf16.msra.mxu0 0
  %2679 = vmatprep.subr.bf16.mxu0 0
  %2680 = vmatpush2.bf16.msra.mxu0 0
  %2681 = vmatprep.subr.bf16.mxu0 0
  %2682 = vmatpush2.bf16.msra.mxu0 0
  %2683 = vmatprep.subr.bf16.mxu0 0
  %2684 = vmatpush2.bf16.msra.mxu0 0
  %2685 = vmatprep.subr.bf16.mxu0 0
  %2686 = vmatpush2.bf16.msra.mxu0 0
  %2687 = vmatprep.mubr.bf16.mxu0 0
  %2688 = vmatmul.mubr.bf16.gmra.mxu0 %v2582
  %v2689 = vpop.f32.mrf.mxu0
  %v2690 = vadd.f32 %v2605, %v2689
  %v2691 = vpop.f32.mrf.mxu0
  %v2692 = vpop.f32.mrf.mxu0
  %v2693 = vadd.f32 %v2605, %v2692
  %v2694 = vpop.f32.mrf.mxu0
  %2695 = vmatprep.mubr.bf16.mxu0 0
  %2696 = vmatmul.mubr.bf16.gmra.mxu0 %v2583
  %v2697 = vpop.f32.mrf.mxu0
  %v2698 = vadd.f32 %v2605, %v2697
  %v2699 = vpop.f32.mrf.mxu0
  %v2700 = vpop.f32.mrf.mxu0
  %v2701 = vadd.f32 %v2605, %v2700
  %v2702 = vpop.f32.mrf.mxu0
  %2703 = vdwg.mxu0
  %v2704 = vmax.f32 %v2690, 0.0
  %v2705 = vmax.f32 %v2693, 0.0
  %v2706 = vmax.f32 %v2698, 0.0
  %v2707 = vmax.f32 %v2701, 0.0
  %v2708 = vpack.c.bf16 %v2705, %v2704
  %v2709 = vpack.c.bf16 %v2707, %v2706
  %v2710 = vld [vmem:[%s11] sm:$0xf]
  %v2711 = vld [vmem:[%s11 + $0x4] sm:$0xf]
  %v2712 = vld [vmem:[%s11 + $0x8] sm:$0xf]
  %v2713 = vld [vmem:[%s11 + $0xc] sm:$0xf]
  %v2714 = vld [vmem:[%s11 + $0x10] sm:$0xf]
  %v2715 = vld [vmem:[%s11 + $0x14] sm:$0xf]
  %v2716 = vld [vmem:[%s11 + $0x18] sm:$0xf]
  %v2717 = vld [vmem:[%s11 + $0x1c] sm:$0xf]
  %v2718 = vld [vmem:[%s12] sm:$0x1]
  %v2720 = vlaneseq
  %v2721 = vshrl.u32 %v2720, 7
  %v2722 = vsub.s32 0, %v2721
  %v2723 = vrot.slane %v2718, %v2722
  %v2733 = vunpack.c.l.b16 %v2710
  %v2734 = vunpack.c.l.b16 %v2711
  %v2735 = vunpack.c.l.b16 %v2712
  %v2736 = vunpack.c.l.b16 %v2713
  %v2737 = vunpack.c.l.b16 %v2714
  %v2738 = vunpack.c.l.b16 %v2715
  %v2739 = vunpack.c.l.b16 %v2716
  %v2740 = vunpack.c.l.b16 %v2717
  %v2741 = vpack.c.b16 %v2734, %v2733
  %v2742 = vpack.c.b16 %v2736, %v2735
  %v2743 = vpack.c.b16 %v2738, %v2737
  %v2744 = vpack.c.b16 %v2740, %v2739
  %vm2749 = vcmask 523264
  %v2751 = vsel %vm2749, %v2708, 0
  %v2754 = vsel %vm2749, %v2709, 0
  %2756 = vmatprep.subr.bf16.mxu0 0
  %2757 = vmatpush1.bf16.msra.mxu0 0
  %2758 = vmatprep.subr.bf16.mxu0 0
  %2759 = vmatpush1.bf16.msra.mxu0 0
  %2760 = vmatprep.subr.bf16.mxu0 0
  %2761 = vmatpush1.bf16.msra.mxu0 0
  %2762 = vmatprep.subr.bf16.mxu0 0
  %2763 = vmatpush1.bf16.msra.mxu0 0
  %2764 = vmatprep.subr.bf16.mxu0 0
  %2765 = vmatpush1.bf16.msra.mxu0 %v2744
  %2766 = vmatprep.subr.bf16.mxu0 0
  %2767 = vmatpush1.bf16.msra.mxu0 %v2743
  %2768 = vmatprep.subr.bf16.mxu0 0
  %2769 = vmatpush1.bf16.msra.mxu0 %v2742
  %2770 = vmatprep.subr.bf16.mxu0 0
  %2771 = vmatpush1.bf16.msra.mxu0 %v2741
  %2772 = vmatprep.subr.bf16.mxu0 0
  %2773 = vmatpush2.bf16.msra.mxu0 0
  %2774 = vmatprep.subr.bf16.mxu0 0
  %2775 = vmatpush2.bf16.msra.mxu0 0
  %2776 = vmatprep.subr.bf16.mxu0 0
  %2777 = vmatpush2.bf16.msra.mxu0 0
  %2778 = vmatprep.subr.bf16.mxu0 0
  %2779 = vmatpush2.bf16.msra.mxu0 0
  %2780 = vmatprep.subr.bf16.mxu0 0
  %2781 = vmatpush2.bf16.msra.mxu0 0
  %2782 = vmatprep.subr.bf16.mxu0 0
  %2783 = vmatpush2.bf16.msra.mxu0 0
  %2784 = vmatprep.subr.bf16.mxu0 0
  %2785 = vmatpush2.bf16.msra.mxu0 0
  %2786 = vmatprep.subr.bf16.mxu0 0
  %2787 = vmatpush2.bf16.msra.mxu0 0
  %2788 = vmatprep.mubr.bf16.mxu0 0
  %2789 = vmatmul.mubr.bf16.gmra.mxu0 %v2751
  %v2790 = vpop.f32.mrf.mxu0
  %v2791 = vadd.f32 %v2723, %v2790
  %v2792 = vpop.f32.mrf.mxu0
  %v2793 = vpop.f32.mrf.mxu0
  %v2794 = vadd.f32 %v2723, %v2793
  %v2795 = vpop.f32.mrf.mxu0
  %2796 = vmatprep.mubr.bf16.mxu0 0
  %2797 = vmatmul.mubr.bf16.gmra.mxu0 %v2754
  %v2798 = vpop.f32.mrf.mxu0
  %v2799 = vadd.f32 %v2723, %v2798
  %v2800 = vpop.f32.mrf.mxu0
  %v2801 = vpop.f32.mrf.mxu0
  %v2802 = vadd.f32 %v2723, %v2801
  %v2803 = vpop.f32.mrf.mxu0
  %2804 = vdwg.mxu0
  %2805 = vmax.xlane.f32.xlu0 %v2791
  %v2806 = vpop.xlane.xlu0 %2805
  %2807 = vmax.xlane.f32.xlu0 %v2794
  %v2808 = vpop.xlane.xlu0 %2807
  %2809 = vmax.xlane.f32.xlu0 %v2799
  %v2810 = vpop.xlane.xlu0 %2809
  %2811 = vmax.xlane.f32.xlu0 %v2802
  %v2812 = vpop.xlane.xlu0 %2811
  %v2813 = vsub.f32 %v2791, %v2806
  %v2814 = vsub.f32 %v2794, %v2808
  %v2815 = vsub.f32 %v2799, %v2810
  %v2816 = vsub.f32 %v2802, %v2812
  %v2817 = vmul.f32 %v2813, 1.442695
  %v2818 = vpow.pop %v2817
  %v2819 = vmul.f32 %v2814, 1.442695
  %v2820 = vpow.pop %v2819
  %v2821 = vmul.f32 %v2815, 1.442695
  %v2822 = vpow.pop %v2821
  %v2823 = vmul.f32 %v2816, 1.442695
  %v2824 = vpow.pop %v2823
  %2825 = vadd.xlane.f32.xlu0 %v2818
  %v2826 = vpop.xlane.xlu0 %2825
  %2827 = vadd.xlane.f32.xlu0 %v2820
  %v2828 = vpop.xlane.xlu0 %2827
  %2829 = vadd.xlane.f32.xlu0 %v2822
  %v2830 = vpop.xlane.xlu0 %2829
  %2831 = vadd.xlane.f32.xlu0 %v2824
  %v2832 = vpop.xlane.xlu0 %2831
  %v2833 = vrcp.pop %v2826
  %v2834 = vrcp.pop %v2828
  %v2835 = vrcp.pop %v2830
  %v2836 = vrcp.pop %v2832
  %v2837 = vmul.f32 %v2826, %v2833
  %v2838 = vmul.f32 %v2828, %v2834
  %v2839 = vmul.f32 %v2830, %v2835
  %v2840 = vmul.f32 %v2832, %v2836
  %v2841 = vsub.f32 2.0, %v2837
  %v2842 = vsub.f32 2.0, %v2838
  %v2843 = vsub.f32 2.0, %v2839
  %v2844 = vsub.f32 2.0, %v2840
  %v2845 = vmul.f32 %v2833, %v2841
  %v2846 = vmul.f32 %v2834, %v2842
  %v2847 = vmul.f32 %v2835, %v2843
  %v2848 = vmul.f32 %v2836, %v2844
  %v2849 = vmul.f32 %v2818, %v2845
  %v2850 = vmul.f32 %v2820, %v2846
  %v2851 = vmul.f32 %v2822, %v2847
  %v2852 = vmul.f32 %v2824, %v2848
  %2853 = vst [vmem:[%s14] sm:$0xff] %v2849
  %2854 = vst [vmem:[%s14 + $0x8] sm:$0xff] %v2850
  %2855 = vst [vmem:[%s14 + $0x10] sm:$0xff] %v2851
  %2856 = vst [vmem:[%s14 + $0x18] sm:$0xff] %v2852
  // Predicated region
  $region54: #{_forward_jit.1} parent=0 // pred_check
    _
  $region55: #{_forward_jit.1} parent=0 // pred_check_branch
    %2858 = sbr.rel (0) target = $region57
  $region56: #{_forward_jit.1} parent=0 // pred_region
    _
  $region57: #{_forward_jit.1} parent=0 // pred_fallthru
    _
  // Predicated region
  $region58: #{_forward_jit.1} parent=0 // pred_check
    _
  $region59: #{_forward_jit.1} parent=0 // pred_check_branch
    %2860 = sbr.rel (0) target = $region61
  $region60: #{_forward_jit.1} parent=0 // pred_region
    _
  $region61: #{_forward_jit.1} parent=0 // pred_fallthru
    _
  // Predicated region
  $region62: #{_forward_jit.1} parent=0 // pred_check
    _
  $region63: #{_forward_jit.1} parent=0 // pred_check_branch
    %2862 = sbr.rel (0) target = $region65
  $region64: #{_forward_jit.1} parent=0 // pred_region
    _
  $region65: #{_forward_jit.1} parent=0 // pred_fallthru
    _
  // Predicated region
  $region66: #{_forward_jit.1} parent=0 // pred_check
    _
  $region67: #{_forward_jit.1} parent=0 // pred_check_branch
    %2864 = sbr.rel (0) target = $region69
  $region68: #{_forward_jit.1} parent=0 // pred_region
    _
  $region69: #{_forward_jit.1} parent=0 // pred_fallthru
    _

</llo_original>
